<compile_context>
chip_gen: v6e
topology: v6e:2x2x1
jax: 0.10.0
libtpu: 0.0.40
codegen_flags: <defaults>
</compile_context>

<pallas_src>
import functools

import jax
import jax.numpy as jnp
from jax import lax
from jax.experimental import pallas as pl
from jax.experimental.pallas import tpu as pltpu


# --------------------------------------------------------------------------
# Tiling helpers
# --------------------------------------------------------------------------

def _sublane_granularity(dtype):
    """Rows per packed sublane tile: f32 -> 8, bf16 -> 16, int8/fp8 -> 32."""
    return max(8, 32 // jnp.dtype(dtype).itemsize)


def _choose_tile_h(H, W, C, dtype, target_bytes=4 << 20):
    """Rows per input tile so that C*TH*W*itemsize <= target_bytes, with TH a
    dtype-aware multiple of the sublane granularity (or the full H).  Prefers
    an exact divisor of H to avoid a ragged edge tile."""
    itemsize = jnp.dtype(dtype).itemsize
    g = _sublane_granularity(dtype)
    row_bytes = C * W * itemsize
    if H * row_bytes <= target_bytes or H <= g:
        return H
    th = int(target_bytes // row_bytes)
    th = max(g, (th // g) * g)
    if th >= H:
        return H
    for cand in range(th, g - 1, -g):        # prefer a divisor of H
        if H % cand == 0:
            return cand
    return th                                 # ragged edge tile -> masked in-kernel


def _vmem_limit_bytes(*terms):
    """Explicit scoped-VMEM budget: footprint + headroom, clamped to [32, 64] MiB."""
    need = int(sum(terms)) + (2 << 20)
    return int(min(max(need, 32 << 20), 64 << 20))


# --------------------------------------------------------------------------
# In-kernel channel sum (the 1x1 conv)
# --------------------------------------------------------------------------

_STATIC_UNROLL_MAX_C = 256   # full static unroll up to here
_N_ACC = 4                   # independent accumulators (breaks serial add chain)


def _channel_sum(x_ref, w_ref, th, w):
    """VPU 1x1 conv: sum_c weight[c] * x[0, c, :, :] -> (th, w) float32."""
    c_total = x_ref.shape[1]
    n_acc = min(_N_ACC, c_total)

    def term(c):
        return w_ref[c] * x_ref[0, c].astype(jnp.float32)

    if c_total <= _STATIC_UNROLL_MAX_C:
        accs = [jnp.zeros((th, w), jnp.float32) for _ in range(n_acc)]
        for c in range(c_total):
            accs[c % n_acc] = accs[c % n_acc] + term(c)
    else:
        # Large C: chunked fori_loop (capped unroll) with n_acc parallel chains.
        n_chunks = c_total // n_acc

        def body(i, carry):
            base = i * n_acc
            return tuple(carry[a] + term(base + a) for a in range(n_acc))

        accs = list(lax.fori_loop(
            0, n_chunks, body,
            tuple(jnp.zeros((th, w), jnp.float32) for _ in range(n_acc)),
            unroll=2))
        for c in range(n_chunks * n_acc, c_total):   # static remainder
            accs[c % n_acc] = accs[c % n_acc] + term(c)

    tot = accs[0]
    for a in range(1, n_acc):
        tot = tot + accs[a]
    return tot


# --------------------------------------------------------------------------
# Kernels
# --------------------------------------------------------------------------

def _conv_kernel(x_ref, w_ref, b_ref, o_ref):
    # x_ref: (1, C, TH, W)   w_ref: (C,) f32 SMEM   b_ref: (1,) f32 SMEM
    # o_ref: (1, 1, TH, W)
    th, w = x_ref.shape[2], x_ref.shape[3]
    s2 = _channel_sum(x_ref, w_ref, th, w)
    o_ref[...] = (s2 + b_ref[0])[None, None].astype(o_ref.dtype)


def _resize_kernel(x_ref, w_ref, b_ref, rht_ref, rwt_ref, o_ref, acc_ref, *,
                   h_total):
    # x_ref  : (1, C, TH, W)  input row tile, original dtype
    # w_ref  : (C,)  f32 SMEM 1x1-conv weight
    # b_ref  : (1,)  f32 SMEM conv bias (added once at the very end)
    # rht_ref: (TH, Ho)  row-interp block, transposed (zero rows beyond H)
    # rwt_ref: (W, Wo)   col-interp matrix, transposed, full extent
    # o_ref  : (1, 1, Ho, Wo)  written only on the last row tile
    # acc_ref: (Ho, W) f32 scratch, persists across the row-tile axis
    k = pl.program_id(1)

    @pl.when(k == 0)
    def _():
        acc_ref[...] = jnp.zeros_like(acc_ref)

    th, w = x_ref.shape[2], x_ref.shape[3]
    s2 = _channel_sum(x_ref, w_ref, th, w)            # (TH, W) f32

    if h_total % th != 0:
        # Ragged edge tile (rare; _choose_tile_h prefers divisors of H):
        # rht already has zero rows beyond H, but mask guards against
        # non-finite garbage rows (0 * NaN = NaN).
        rows = lax.broadcasted_iota(jnp.int32, (th, 1), 0) + k * th
        s2 = jnp.where(rows < h_total, s2, 0.0)

    # Row interpolation only: acc(Ho, W) += Rh_block @ s2.  The column matmul
    # is hoisted out of the row-tile loop (done once at the last tile).
    acc_ref[...] += lax.dot_general(
        rht_ref[...], s2,
        dimension_numbers=(((0,), (0,)), ((), ())),
        preferred_element_type=jnp.float32)

    @pl.when(k == pl.num_programs(1) - 1)
    def _():
        res = jnp.dot(acc_ref[...], rwt_ref[...],
                      preferred_element_type=jnp.float32) + b_ref[0]
        o_ref[...] = res[None, None].astype(o_ref.dtype)


# --------------------------------------------------------------------------
# Bilinear (align_corners=True) interpolation matrix
# --------------------------------------------------------------------------

def _interp_matrix(n_out, n_in, dtype=jnp.float32):
    """Row-stochastic (n_out, n_in) matrix for 1-D bilinear interpolation with
    align_corners=True (PyTorch semantics)."""
    if n_out == 1:
        src = jnp.zeros((1,), dtype=jnp.float32)
    else:
        scale = (n_in - 1) / (n_out - 1)
        src = jnp.arange(n_out, dtype=jnp.float32) * scale
    i0 = jnp.clip(jnp.floor(src).astype(jnp.int32), 0, n_in - 1)
    i1 = jnp.clip(i0 + 1, 0, n_in - 1)
    frac = src - i0.astype(jnp.float32)
    rows = jnp.arange(n_out)
    R = jnp.zeros((n_out, n_in), dtype=jnp.float32)
    R = R.at[rows, i0].add(1.0 - frac)
    R = R.at[rows, i1].add(frac)
    return R.astype(dtype)


# --------------------------------------------------------------------------
# Wrapper
# --------------------------------------------------------------------------

@functools.partial(jax.jit, static_argnames=("out_hw",))
def _score_layer_impl(x, weight, bias, out_hw):
    B, C, H, W = x.shape
    w = weight.reshape(C).astype(jnp.float32)          # (C,)   -> SMEM
    b = bias.reshape(1).astype(jnp.float32)            # (1,)   -> SMEM
    in_itemsize = jnp.dtype(x.dtype).itemsize
    th = _choose_tile_h(H, W, C, x.dtype)
    n_h = pl.cdiv(H, th)

    smem = pl.BlockSpec(memory_space=pltpu.MemorySpace.SMEM)
    in_tile_bytes = C * th * W * in_itemsize

    if out_hw == (H, W):
        # Conv-only path: skip the (identity) resize entirely.
        vmem_limit = _vmem_limit_bytes(2 * in_tile_bytes,
                                       2 * th * W * in_itemsize)
        return pl.pallas_call(
            _conv_kernel,
            out_shape=jax.ShapeDtypeStruct((B, 1, H, W), x.dtype),
            grid_spec=pltpu.PrefetchScalarGridSpec(
                num_scalar_prefetch=0,
                grid=(B, n_h),
                in_specs=[
                    pl.BlockSpec((1, C, th, W), lambda b_, k_: (b_, 0, k_, 0)),
                    smem,
                    smem,
                ],
                out_specs=pl.BlockSpec((1, 1, th, W),
                                       lambda b_, k_: (b_, 0, k_, 0)),
            ),
            compiler_params=pltpu.CompilerParams(
                dimension_semantics=("parallel", "parallel"),
                vmem_limit_bytes=vmem_limit),
        )(x, w, b)

    Ho, Wo = out_hw
    h_pad = n_h * th
    rht = jnp.zeros((h_pad, Ho), jnp.float32).at[:H, :].set(
        _interp_matrix(Ho, H).T)                       # (H_pad, Ho), zero rows beyond H
    rwt = _interp_matrix(Wo, W).T                      # (W, Wo), full-extent block

    vmem_limit = _vmem_limit_bytes(
        2 * in_tile_bytes,              # double-buffered input tiles
        2 * th * Ho * 4,                # rht blocks
        2 * W * Wo * 4,                 # rwt
        Ho * W * 4,                     # accumulator scratch
        2 * Ho * Wo * in_itemsize)      # output block

    # TODO(synk): for v7x single-image (B == 1) inference, add a second
    # "parallel" grid axis over Ho blocks so both TensorCores are used.
    kernel = functools.partial(_resize_kernel, h_total=H)
    return pl.pallas_call(
        kernel,
        out_shape=jax.ShapeDtypeStruct((B, 1, Ho, Wo), x.dtype),
        grid_spec=pltpu.PrefetchScalarGridSpec(
            num_scalar_prefetch=0,
            grid=(B, n_h),
            in_specs=[
                pl.BlockSpec((1, C, th, W), lambda b_, k_: (b_, 0, k_, 0)),
                smem,
                smem,
                pl.BlockSpec((th, Ho), lambda b_, k_: (k_, 0)),
                pl.BlockSpec((W, Wo), lambda b_, k_: (0, 0)),
            ],
            out_specs=pl.BlockSpec((1, 1, Ho, Wo),
                                   lambda b_, k_: (b_, 0, 0, 0)),
            scratch_shapes=[pltpu.VMEM((Ho, W), jnp.float32)],
        ),
        compiler_params=pltpu.CompilerParams(
            dimension_semantics=("parallel", "arbitrary"),
            vmem_limit_bytes=vmem_limit),
    )(x, w, b, rht, rwt)


def score_layer(x_nchw, weight, bias, x_size=None):
    """Pallas implementation of ScoreLayer.forward.

    x_nchw : (B, k, H, W)   input (NCHW, PyTorch convention), any float dtype
    weight : (1, k, 1, 1)   Conv2d(k, 1, 1) weight
    bias   : (1,)           Conv2d bias
    x_size : optional tuple like a torch tensor .shape -> (B', C', H_out, W_out)
    """
    _, _, H, W = x_nchw.shape
    if x_size is None:
        out_hw = (H, W)
    else:
        out_hw = (int(x_size[2]), int(x_size[3]))
    return _score_layer_impl(x_nchw, weight, bias, out_hw)


# --------------------------------------------------------------------------
# Pure-JAX reference & self-test
# --------------------------------------------------------------------------

def _reference(x_nchw, weight, bias, x_size=None):
    B, C, H, W = x_nchw.shape
    w = weight.reshape(1, C)
    y = jnp.einsum("bchw,oc->bohw", x_nchw.astype(jnp.float32), w) \
        + bias.reshape(1, 1, 1, 1)
    if x_size is None:
        return y
    Ho, Wo = int(x_size[2]), int(x_size[3])
    rh = _interp_matrix(Ho, H)
    rw = _interp_matrix(Wo, W)
    return jnp.einsum("pi,bcij,qj->bcpq", rh, y, rw)


if __name__ == "__main__":
    k = 64               # channels, as in the module definition
    B, H, W = 2, 16, 16  # small synthetic shapes
    out_size = (B, 1, 32, 32)  # mimics a torch tensor .shape passed as x_size

    key = jax.random.PRNGKey(0)
    kx, kw, kb = jax.random.split(key, 3)
    x = jax.random.normal(kx, (B, k, H, W), dtype=jnp.float32)
    weight = jax.random.normal(kw, (1, k, 1, 1), dtype=jnp.float32) * 0.05
    bias = jax.random.normal(kb, (1,), dtype=jnp.float32) * 0.05

    # path 1: conv only (x_size=None)
    y0 = score_layer(x, weight, bias, x_size=None)
    jax.block_until_ready(y0)
    r0 = _reference(x, weight, bias, x_size=None)

    # path 2: conv + bilinear upsample (align_corners=True)
    y1 = score_layer(x, weight, bias, x_size=out_size)
    jax.block_until_ready(y1)
    r1 = _reference(x, weight, bias, x_size=out_size)

    assert y0.shape == (B, 1, H, W)
    assert y1.shape == (B, 1, out_size[2], out_size[3])
    assert jnp.allclose(y0, r0, atol=1e-4, rtol=1e-4)
    assert jnp.allclose(y1, r1, atol=1e-4, rtol=1e-4)

    print("KERNEL_OK")
</pallas_src>

<mosaic_0001>
module attributes {stable_mosaic.version = 11 : i64} {
  func.func @_conv_kernel(%arg0: i32, %arg1: i32, %arg2: memref<1x64x16x16xf32, #tpu.memory_space<vmem>>, %arg3: memref<64xf32, #tpu.memory_space<smem>>, %arg4: memref<1xf32, #tpu.memory_space<smem>>, %arg5: memref<1x1x16x16xf32, #tpu.memory_space<vmem>>) attributes {dimension_semantics = [#tpu.dimension_semantics<parallel>, #tpu.dimension_semantics<parallel>], iteration_bounds = array<i64: 2, 1>, scalar_prefetch = 0 : i64, scratch_operands = 0 : i64, tpu.core_type = #tpu.core_type<tc>, window_params = [{transform_indices = @transform_0, window_bounds = array<i64: 1, 64, 16, 16>}, {transform_indices = @transform_1, window_bounds = array<i64: 64>}, {transform_indices = @transform_2, window_bounds = array<i64: 1>}, {transform_indices = @transform_3, window_bounds = array<i64: 1, 1, 16, 16>}]} {
    %cst = arith.constant 0.000000e+00 : f32
    %0 = vector.broadcast %cst : f32 to vector<16x16xf32>
    %cst_0 = arith.constant 0.000000e+00 : f32
    %1 = vector.broadcast %cst_0 : f32 to vector<16x16xf32>
    %cst_1 = arith.constant 0.000000e+00 : f32
    %2 = vector.broadcast %cst_1 : f32 to vector<16x16xf32>
    %cst_2 = arith.constant 0.000000e+00 : f32
    %3 = vector.broadcast %cst_2 : f32 to vector<16x16xf32>
    %c0 = arith.constant 0 : index
    %4 = memref.load %arg3[%c0] : memref<64xf32, #tpu.memory_space<smem>>
    %c0_3 = arith.constant 0 : index
    %c0_4 = arith.constant 0 : index
    %c0_5 = arith.constant 0 : index
    %c0_6 = arith.constant 0 : index
    %5 = vector.load %arg2[%c0_3, %c0_4, %c0_5, %c0_6] : memref<1x64x16x16xf32, #tpu.memory_space<vmem>>, vector<1x1x16x16xf32>
    %6 = vector.shape_cast %5 : vector<1x1x16x16xf32> to vector<16x16xf32>
    %7 = vector.broadcast %4 : f32 to vector<16x16xf32>
    %8 = arith.mulf %7, %6 : vector<16x16xf32>
    %9 = arith.addf %0, %8 : vector<16x16xf32>
    %c1 = arith.constant 1 : index
    %10 = memref.load %arg3[%c1] : memref<64xf32, #tpu.memory_space<smem>>
    %c0_7 = arith.constant 0 : index
    %c1_8 = arith.constant 1 : index
    %c0_9 = arith.constant 0 : index
    %c0_10 = arith.constant 0 : index
    %11 = vector.load %arg2[%c0_7, %c1_8, %c0_9, %c0_10] : memref<1x64x16x16xf32, #tpu.memory_space<vmem>>, vector<1x1x16x16xf32>
    %12 = vector.shape_cast %11 : vector<1x1x16x16xf32> to vector<16x16xf32>
    %13 = vector.broadcast %10 : f32 to vector<16x16xf32>
    %14 = arith.mulf %13, %12 : vector<16x16xf32>
    %15 = arith.addf %1, %14 : vector<16x16xf32>
    %c2 = arith.constant 2 : index
    %16 = memref.load %arg3[%c2] : memref<64xf32, #tpu.memory_space<smem>>
    %c0_11 = arith.constant 0 : index
    %c2_12 = arith.constant 2 : index
    %c0_13 = arith.constant 0 : index
    %c0_14 = arith.constant 0 : index
    %17 = vector.load %arg2[%c0_11, %c2_12, %c0_13, %c0_14] : memref<1x64x16x16xf32, #tpu.memory_space<vmem>>, vector<1x1x16x16xf32>
    %18 = vector.shape_cast %17 : vector<1x1x16x16xf32> to vector<16x16xf32>
    %19 = vector.broadcast %16 : f32 to vector<16x16xf32>
    %20 = arith.mulf %19, %18 : vector<16x16xf32>
    %21 = arith.addf %2, %20 : vector<16x16xf32>
    %c3 = arith.constant 3 : index
    %22 = memref.load %arg3[%c3] : memref<64xf32, #tpu.memory_space<smem>>
    %c0_15 = arith.constant 0 : index
    %c3_16 = arith.constant 3 : index
    %c0_17 = arith.constant 0 : index
    %c0_18 = arith.constant 0 : index
    %23 = vector.load %arg2[%c0_15, %c3_16, %c0_17, %c0_18] : memref<1x64x16x16xf32, #tpu.memory_space<vmem>>, vector<1x1x16x16xf32>
    %24 = vector.shape_cast %23 : vector<1x1x16x16xf32> to vector<16x16xf32>
    %25 = vector.broadcast %22 : f32 to vector<16x16xf32>
    %26 = arith.mulf %25, %24 : vector<16x16xf32>
    %27 = arith.addf %3, %26 : vector<16x16xf32>
    %c4 = arith.constant 4 : index
    %28 = memref.load %arg3[%c4] : memref<64xf32, #tpu.memory_space<smem>>
    %c0_19 = arith.constant 0 : index
    %c4_20 = arith.constant 4 : index
    %c0_21 = arith.constant 0 : index
    %c0_22 = arith.constant 0 : index
    %29 = vector.load %arg2[%c0_19, %c4_20, %c0_21, %c0_22] : memref<1x64x16x16xf32, #tpu.memory_space<vmem>>, vector<1x1x16x16xf32>
    %30 = vector.shape_cast %29 : vector<1x1x16x16xf32> to vector<16x16xf32>
    %31 = vector.broadcast %28 : f32 to vector<16x16xf32>
    %32 = arith.mulf %31, %30 : vector<16x16xf32>
    %33 = arith.addf %9, %32 : vector<16x16xf32>
    %c5 = arith.constant 5 : index
    %34 = memref.load %arg3[%c5] : memref<64xf32, #tpu.memory_space<smem>>
    %c0_23 = arith.constant 0 : index
    %c5_24 = arith.constant 5 : index
    %c0_25 = arith.constant 0 : index
    %c0_26 = arith.constant 0 : index
    %35 = vector.load %arg2[%c0_23, %c5_24, %c0_25, %c0_26] : memref<1x64x16x16xf32, #tpu.memory_space<vmem>>, vector<1x1x16x16xf32>
    %36 = vector.shape_cast %35 : vector<1x1x16x16xf32> to vector<16x16xf32>
    %37 = vector.broadcast %34 : f32 to vector<16x16xf32>
    %38 = arith.mulf %37, %36 : vector<16x16xf32>
    %39 = arith.addf %15, %38 : vector<16x16xf32>
    %c6 = arith.constant 6 : index
    %40 = memref.load %arg3[%c6] : memref<64xf32, #tpu.memory_space<smem>>
    %c0_27 = arith.constant 0 : index
    %c6_28 = arith.constant 6 : index
    %c0_29 = arith.constant 0 : index
    %c0_30 = arith.constant 0 : index
    %41 = vector.load %arg2[%c0_27, %c6_28, %c0_29, %c0_30] : memref<1x64x16x16xf32, #tpu.memory_space<vmem>>, vector<1x1x16x16xf32>
    %42 = vector.shape_cast %41 : vector<1x1x16x16xf32> to vector<16x16xf32>
    %43 = vector.broadcast %40 : f32 to vector<16x16xf32>
    %44 = arith.mulf %43, %42 : vector<16x16xf32>
    %45 = arith.addf %21, %44 : vector<16x16xf32>
    %c7 = arith.constant 7 : index
    %46 = memref.load %arg3[%c7] : memref<64xf32, #tpu.memory_space<smem>>
    %c0_31 = arith.constant 0 : index
    %c7_32 = arith.constant 7 : index
    %c0_33 = arith.constant 0 : index
    %c0_34 = arith.constant 0 : index
    %47 = vector.load %arg2[%c0_31, %c7_32, %c0_33, %c0_34] : memref<1x64x16x16xf32, #tpu.memory_space<vmem>>, vector<1x1x16x16xf32>
    %48 = vector.shape_cast %47 : vector<1x1x16x16xf32> to vector<16x16xf32>
    %49 = vector.broadcast %46 : f32 to vector<16x16xf32>
    %50 = arith.mulf %49, %48 : vector<16x16xf32>
    %51 = arith.addf %27, %50 : vector<16x16xf32>
    %c8 = arith.constant 8 : index
    %52 = memref.load %arg3[%c8] : memref<64xf32, #tpu.memory_space<smem>>
    %c0_35 = arith.constant 0 : index
    %c8_36 = arith.constant 8 : index
    %c0_37 = arith.constant 0 : index
    %c0_38 = arith.constant 0 : index
    %53 = vector.load %arg2[%c0_35, %c8_36, %c0_37, %c0_38] : memref<1x64x16x16xf32, #tpu.memory_space<vmem>>, vector<1x1x16x16xf32>
    %54 = vector.shape_cast %53 : vector<1x1x16x16xf32> to vector<16x16xf32>
    %55 = vector.broadcast %52 : f32 to vector<16x16xf32>
    %56 = arith.mulf %55, %54 : vector<16x16xf32>
    %57 = arith.addf %33, %56 : vector<16x16xf32>
    %c9 = arith.constant 9 : index
    %58 = memref.load %arg3[%c9] : memref<64xf32, #tpu.memory_space<smem>>
    %c0_39 = arith.constant 0 : index
    %c9_40 = arith.constant 9 : index
    %c0_41 = arith.constant 0 : index
    %c0_42 = arith.constant 0 : index
    %59 = vector.load %arg2[%c0_39, %c9_40, %c0_41, %c0_42] : memref<1x64x16x16xf32, #tpu.memory_space<vmem>>, vector<1x1x16x16xf32>
    %60 = vector.shape_cast %59 : vector<1x1x16x16xf32> to vector<16x16xf32>
    %61 = vector.broadcast %58 : f32 to vector<16x16xf32>
    %62 = arith.mulf %61, %60 : vector<16x16xf32>
    %63 = arith.addf %39, %62 : vector<16x16xf32>
    %c10 = arith.constant 10 : index
    %64 = memref.load %arg3[%c10] : memref<64xf32, #tpu.memory_space<smem>>
    %c0_43 = arith.constant 0 : index
    %c10_44 = arith.constant 10 : index
    %c0_45 = arith.constant 0 : index
    %c0_46 = arith.constant 0 : index
    %65 = vector.load %arg2[%c0_43, %c10_44, %c0_45, %c0_46] : memref<1x64x16x16xf32, #tpu.memory_space<vmem>>, vector<1x1x16x16xf32>
    %66 = vector.shape_cast %65 : vector<1x1x16x16xf32> to vector<16x16xf32>
    %67 = vector.broadcast %64 : f32 to vector<16x16xf32>
    %68 = arith.mulf %67, %66 : vector<16x16xf32>
    %69 = arith.addf %45, %68 : vector<16x16xf32>
    %c11 = arith.constant 11 : index
    %70 = memref.load %arg3[%c11] : memref<64xf32, #tpu.memory_space<smem>>
    %c0_47 = arith.constant 0 : index
    %c11_48 = arith.constant 11 : index
    %c0_49 = arith.constant 0 : index
    %c0_50 = arith.constant 0 : index
    %71 = vector.load %arg2[%c0_47, %c11_48, %c0_49, %c0_50] : memref<1x64x16x16xf32, #tpu.memory_space<vmem>>, vector<1x1x16x16xf32>
    %72 = vector.shape_cast %71 : vector<1x1x16x16xf32> to vector<16x16xf32>
    %73 = vector.broadcast %70 : f32 to vector<16x16xf32>
    %74 = arith.mulf %73, %72 : vector<16x16xf32>
    %75 = arith.addf %51, %74 : vector<16x16xf32>
    %c12 = arith.constant 12 : index
    %76 = memref.load %arg3[%c12] : memref<64xf32, #tpu.memory_space<smem>>
    %c0_51 = arith.constant 0 : index
    %c12_52 = arith.constant 12 : index
    %c0_53 = arith.constant 0 : index
    %c0_54 = arith.constant 0 : index
    %77 = vector.load %arg2[%c0_51, %c12_52, %c0_53, %c0_54] : memref<1x64x16x16xf32, #tpu.memory_space<vmem>>, vector<1x1x16x16xf32>
    %78 = vector.shape_cast %77 : vector<1x1x16x16xf32> to vector<16x16xf32>
    %79 = vector.broadcast %76 : f32 to vector<16x16xf32>
    %80 = arith.mulf %79, %78 : vector<16x16xf32>
    %81 = arith.addf %57, %80 : vector<16x16xf32>
    %c13 = arith.constant 13 : index
    %82 = memref.load %arg3[%c13] : memref<64xf32, #tpu.memory_space<smem>>
    %c0_55 = arith.constant 0 : index
    %c13_56 = arith.constant 13 : index
    %c0_57 = arith.constant 0 : index
    %c0_58 = arith.constant 0 : index
    %83 = vector.load %arg2[%c0_55, %c13_56, %c0_57, %c0_58] : memref<1x64x16x16xf32, #tpu.memory_space<vmem>>, vector<1x1x16x16xf32>
    %84 = vector.shape_cast %83 : vector<1x1x16x16xf32> to vector<16x16xf32>
    %85 = vector.broadcast %82 : f32 to vector<16x16xf32>
    %86 = arith.mulf %85, %84 : vector<16x16xf32>
    %87 = arith.addf %63, %86 : vector<16x16xf32>
    %c14 = arith.constant 14 : index
    %88 = memref.load %arg3[%c14] : memref<64xf32, #tpu.memory_space<smem>>
    %c0_59 = arith.constant 0 : index
    %c14_60 = arith.constant 14 : index
    %c0_61 = arith.constant 0 : index
    %c0_62 = arith.constant 0 : index
    %89 = vector.load %arg2[%c0_59, %c14_60, %c0_61, %c0_62] : memref<1x64x16x16xf32, #tpu.memory_space<vmem>>, vector<1x1x16x16xf32>
    %90 = vector.shape_cast %89 : vector<1x1x16x16xf32> to vector<16x16xf32>
    %91 = vector.broadcast %88 : f32 to vector<16x16xf32>
    %92 = arith.mulf %91, %90 : vector<16x16xf32>
    %93 = arith.addf %69, %92 : vector<16x16xf32>
    %c15 = arith.constant 15 : index
    %94 = memref.load %arg3[%c15] : memref<64xf32, #tpu.memory_space<smem>>
    %c0_63 = arith.constant 0 : index
    %c15_64 = arith.constant 15 : index
    %c0_65 = arith.constant 0 : index
    %c0_66 = arith.constant 0 : index
    %95 = vector.load %arg2[%c0_63, %c15_64, %c0_65, %c0_66] : memref<1x64x16x16xf32, #tpu.memory_space<vmem>>, vector<1x1x16x16xf32>
    %96 = vector.shape_cast %95 : vector<1x1x16x16xf32> to vector<16x16xf32>
    %97 = vector.broadcast %94 : f32 to vector<16x16xf32>
    %98 = arith.mulf %97, %96 : vector<16x16xf32>
    %99 = arith.addf %75, %98 : vector<16x16xf32>
    %c16 = arith.constant 16 : index
    %100 = memref.load %arg3[%c16] : memref<64xf32, #tpu.memory_space<smem>>
    %c0_67 = arith.constant 0 : index
    %c16_68 = arith.constant 16 : index
    %c0_69 = arith.constant 0 : index
    %c0_70 = arith.constant 0 : index
    %101 = vector.load %arg2[%c0_67, %c16_68, %c0_69, %c0_70] : memref<1x64x16x16xf32, #tpu.memory_space<vmem>>, vector<1x1x16x16xf32>
    %102 = vector.shape_cast %101 : vector<1x1x16x16xf32> to vector<16x16xf32>
    %103 = vector.broadcast %100 : f32 to vector<16x16xf32>
    %104 = arith.mulf %103, %102 : vector<16x16xf32>
    %105 = arith.addf %81, %104 : vector<16x16xf32>
    %c17 = arith.constant 17 : index
    %106 = memref.load %arg3[%c17] : memref<64xf32, #tpu.memory_space<smem>>
    %c0_71 = arith.constant 0 : index
    %c17_72 = arith.constant 17 : index
    %c0_73 = arith.constant 0 : index
    %c0_74 = arith.constant 0 : index
    %107 = vector.load %arg2[%c0_71, %c17_72, %c0_73, %c0_74] : memref<1x64x16x16xf32, #tpu.memory_space<vmem>>, vector<1x1x16x16xf32>
    %108 = vector.shape_cast %107 : vector<1x1x16x16xf32> to vector<16x16xf32>
    %109 = vector.broadcast %106 : f32 to vector<16x16xf32>
    %110 = arith.mulf %109, %108 : vector<16x16xf32>
    %111 = arith.addf %87, %110 : vector<16x16xf32>
    %c18 = arith.constant 18 : index
    %112 = memref.load %arg3[%c18] : memref<64xf32, #tpu.memory_space<smem>>
    %c0_75 = arith.constant 0 : index
    %c18_76 = arith.constant 18 : index
    %c0_77 = arith.constant 0 : index
    %c0_78 = arith.constant 0 : index
    %113 = vector.load %arg2[%c0_75, %c18_76, %c0_77, %c0_78] : memref<1x64x16x16xf32, #tpu.memory_space<vmem>>, vector<1x1x16x16xf32>
    %114 = vector.shape_cast %113 : vector<1x1x16x16xf32> to vector<16x16xf32>
    %115 = vector.broadcast %112 : f32 to vector<16x16xf32>
    %116 = arith.mulf %115, %114 : vector<16x16xf32>
    %117 = arith.addf %93, %116 : vector<16x16xf32>
    %c19 = arith.constant 19 : index
    %118 = memref.load %arg3[%c19] : memref<64xf32, #tpu.memory_space<smem>>
    %c0_79 = arith.constant 0 : index
    %c19_80 = arith.constant 19 : index
    %c0_81 = arith.constant 0 : index
    %c0_82 = arith.constant 0 : index
    %119 = vector.load %arg2[%c0_79, %c19_80, %c0_81, %c0_82] : memref<1x64x16x16xf32, #tpu.memory_space<vmem>>, vector<1x1x16x16xf32>
    %120 = vector.shape_cast %119 : vector<1x1x16x16xf32> to vector<16x16xf32>
    %121 = vector.broadcast %118 : f32 to vector<16x16xf32>
    %122 = arith.mulf %121, %120 : vector<16x16xf32>
    %123 = arith.addf %99, %122 : vector<16x16xf32>
    %c20 = arith.constant 20 : index
    %124 = memref.load %arg3[%c20] : memref<64xf32, #tpu.memory_space<smem>>
    %c0_83 = arith.constant 0 : index
    %c20_84 = arith.constant 20 : index
    %c0_85 = arith.constant 0 : index
    %c0_86 = arith.constant 0 : index
    %125 = vector.load %arg2[%c0_83, %c20_84, %c0_85, %c0_86] : memref<1x64x16x16xf32, #tpu.memory_space<vmem>>, vector<1x1x16x16xf32>
    %126 = vector.shape_cast %125 : vector<1x1x16x16xf32> to vector<16x16xf32>
    %127 = vector.broadcast %124 : f32 to vector<16x16xf32>
    %128 = arith.mulf %127, %126 : vector<16x16xf32>
    %129 = arith.addf %105, %128 : vector<16x16xf32>
    %c21 = arith.constant 21 : index
    %130 = memref.load %arg3[%c21] : memref<64xf32, #tpu.memory_space<smem>>
    %c0_87 = arith.constant 0 : index
    %c21_88 = arith.constant 21 : index
    %c0_89 = arith.constant 0 : index
    %c0_90 = arith.constant 0 : index
    %131 = vector.load %arg2[%c0_87, %c21_88, %c0_89, %c0_90] : memref<1x64x16x16xf32, #tpu.memory_space<vmem>>, vector<1x1x16x16xf32>
    %132 = vector.shape_cast %131 : vector<1x1x16x16xf32> to vector<16x16xf32>
    %133 = vector.broadcast %130 : f32 to vector<16x16xf32>
    %134 = arith.mulf %133, %132 : vector<16x16xf32>
    %135 = arith.addf %111, %134 : vector<16x16xf32>
    %c22 = arith.constant 22 : index
    %136 = memref.load %arg3[%c22] : memref<64xf32, #tpu.memory_space<smem>>
    %c0_91 = arith.constant 0 : index
    %c22_92 = arith.constant 22 : index
    %c0_93 = arith.constant 0 : index
    %c0_94 = arith.constant 0 : index
    %137 = vector.load %arg2[%c0_91, %c22_92, %c0_93, %c0_94] : memref<1x64x16x16xf32, #tpu.memory_space<vmem>>, vector<1x1x16x16xf32>
    %138 = vector.shape_cast %137 : vector<1x1x16x16xf32> to vector<16x16xf32>
    %139 = vector.broadcast %136 : f32 to vector<16x16xf32>
    %140 = arith.mulf %139, %138 : vector<16x16xf32>
    %141 = arith.addf %117, %140 : vector<16x16xf32>
    %c23 = arith.constant 23 : index
    %142 = memref.load %arg3[%c23] : memref<64xf32, #tpu.memory_space<smem>>
    %c0_95 = arith.constant 0 : index
    %c23_96 = arith.constant 23 : index
    %c0_97 = arith.constant 0 : index
    %c0_98 = arith.constant 0 : index
    %143 = vector.load %arg2[%c0_95, %c23_96, %c0_97, %c0_98] : memref<1x64x16x16xf32, #tpu.memory_space<vmem>>, vector<1x1x16x16xf32>
    %144 = vector.shape_cast %143 : vector<1x1x16x16xf32> to vector<16x16xf32>
    %145 = vector.broadcast %142 : f32 to vector<16x16xf32>
    %146 = arith.mulf %145, %144 : vector<16x16xf32>
    %147 = arith.addf %123, %146 : vector<16x16xf32>
    %c24 = arith.constant 24 : index
    %148 = memref.load %arg3[%c24] : memref<64xf32, #tpu.memory_space<smem>>
    %c0_99 = arith.constant 0 : index
    %c24_100 = arith.constant 24 : index
    %c0_101 = arith.constant 0 : index
    %c0_102 = arith.constant 0 : index
    %149 = vector.load %arg2[%c0_99, %c24_100, %c0_101, %c0_102] : memref<1x64x16x16xf32, #tpu.memory_space<vmem>>, vector<1x1x16x16xf32>
    %150 = vector.shape_cast %149 : vector<1x1x16x16xf32> to vector<16x16xf32>
    %151 = vector.broadcast %148 : f32 to vector<16x16xf32>
    %152 = arith.mulf %151, %150 : vector<16x16xf32>
    %153 = arith.addf %129, %152 : vector<16x16xf32>
    %c25 = arith.constant 25 : index
    %154 = memref.load %arg3[%c25] : memref<64xf32, #tpu.memory_space<smem>>
    %c0_103 = arith.constant 0 : index
    %c25_104 = arith.constant 25 : index
    %c0_105 = arith.constant 0 : index
    %c0_106 = arith.constant 0 : index
    %155 = vector.load %arg2[%c0_103, %c25_104, %c0_105, %c0_106] : memref<1x64x16x16xf32, #tpu.memory_space<vmem>>, vector<1x1x16x16xf32>
    %156 = vector.shape_cast %155 : vector<1x1x16x16xf32> to vector<16x16xf32>
    %157 = vector.broadcast %154 : f32 to vector<16x16xf32>
    %158 = arith.mulf %157, %156 : vector<16x16xf32>
    %159 = arith.addf %135, %158 : vector<16x16xf32>
    %c26 = arith.constant 26 : index
    %160 = memref.load %arg3[%c26] : memref<64xf32, #tpu.memory_space<smem>>
    %c0_107 = arith.constant 0 : index
    %c26_108 = arith.constant 26 : index
    %c0_109 = arith.constant 0 : index
    %c0_110 = arith.constant 0 : index
    %161 = vector.load %arg2[%c0_107, %c26_108, %c0_109, %c0_110] : memref<1x64x16x16xf32, #tpu.memory_space<vmem>>, vector<1x1x16x16xf32>
    %162 = vector.shape_cast %161 : vector<1x1x16x16xf32> to vector<16x16xf32>
    %163 = vector.broadcast %160 : f32 to vector<16x16xf32>
    %164 = arith.mulf %163, %162 : vector<16x16xf32>
    %165 = arith.addf %141, %164 : vector<16x16xf32>
    %c27 = arith.constant 27 : index
    %166 = memref.load %arg3[%c27] : memref<64xf32, #tpu.memory_space<smem>>
    %c0_111 = arith.constant 0 : index
    %c27_112 = arith.constant 27 : index
    %c0_113 = arith.constant 0 : index
    %c0_114 = arith.constant 0 : index
    %167 = vector.load %arg2[%c0_111, %c27_112, %c0_113, %c0_114] : memref<1x64x16x16xf32, #tpu.memory_space<vmem>>, vector<1x1x16x16xf32>
    %168 = vector.shape_cast %167 : vector<1x1x16x16xf32> to vector<16x16xf32>
    %169 = vector.broadcast %166 : f32 to vector<16x16xf32>
    %170 = arith.mulf %169, %168 : vector<16x16xf32>
    %171 = arith.addf %147, %170 : vector<16x16xf32>
    %c28 = arith.constant 28 : index
    %172 = memref.load %arg3[%c28] : memref<64xf32, #tpu.memory_space<smem>>
    %c0_115 = arith.constant 0 : index
    %c28_116 = arith.constant 28 : index
    %c0_117 = arith.constant 0 : index
    %c0_118 = arith.constant 0 : index
    %173 = vector.load %arg2[%c0_115, %c28_116, %c0_117, %c0_118] : memref<1x64x16x16xf32, #tpu.memory_space<vmem>>, vector<1x1x16x16xf32>
    %174 = vector.shape_cast %173 : vector<1x1x16x16xf32> to vector<16x16xf32>
    %175 = vector.broadcast %172 : f32 to vector<16x16xf32>
    %176 = arith.mulf %175, %174 : vector<16x16xf32>
    %177 = arith.addf %153, %176 : vector<16x16xf32>
    %c29 = arith.constant 29 : index
    %178 = memref.load %arg3[%c29] : memref<64xf32, #tpu.memory_space<smem>>
    %c0_119 = arith.constant 0 : index
    %c29_120 = arith.constant 29 : index
    %c0_121 = arith.constant 0 : index
    %c0_122 = arith.constant 0 : index
    %179 = vector.load %arg2[%c0_119, %c29_120, %c0_121, %c0_122] : memref<1x64x16x16xf32, #tpu.memory_space<vmem>>, vector<1x1x16x16xf32>
    %180 = vector.shape_cast %179 : vector<1x1x16x16xf32> to vector<16x16xf32>
    %181 = vector.broadcast %178 : f32 to vector<16x16xf32>
    %182 = arith.mulf %181, %180 : vector<16x16xf32>
    %183 = arith.addf %159, %182 : vector<16x16xf32>
    %c30 = arith.constant 30 : index
    %184 = memref.load %arg3[%c30] : memref<64xf32, #tpu.memory_space<smem>>
    %c0_123 = arith.constant 0 : index
    %c30_124 = arith.constant 30 : index
    %c0_125 = arith.constant 0 : index
    %c0_126 = arith.constant 0 : index
    %185 = vector.load %arg2[%c0_123, %c30_124, %c0_125, %c0_126] : memref<1x64x16x16xf32, #tpu.memory_space<vmem>>, vector<1x1x16x16xf32>
    %186 = vector.shape_cast %185 : vector<1x1x16x16xf32> to vector<16x16xf32>
    %187 = vector.broadcast %184 : f32 to vector<16x16xf32>
    %188 = arith.mulf %187, %186 : vector<16x16xf32>
    %189 = arith.addf %165, %188 : vector<16x16xf32>
    %c31 = arith.constant 31 : index
    %190 = memref.load %arg3[%c31] : memref<64xf32, #tpu.memory_space<smem>>
    %c0_127 = arith.constant 0 : index
    %c31_128 = arith.constant 31 : index
    %c0_129 = arith.constant 0 : index
    %c0_130 = arith.constant 0 : index
    %191 = vector.load %arg2[%c0_127, %c31_128, %c0_129, %c0_130] : memref<1x64x16x16xf32, #tpu.memory_space<vmem>>, vector<1x1x16x16xf32>
    %192 = vector.shape_cast %191 : vector<1x1x16x16xf32> to vector<16x16xf32>
    %193 = vector.broadcast %190 : f32 to vector<16x16xf32>
    %194 = arith.mulf %193, %192 : vector<16x16xf32>
    %195 = arith.addf %171, %194 : vector<16x16xf32>
    %c32 = arith.constant 32 : index
    %196 = memref.load %arg3[%c32] : memref<64xf32, #tpu.memory_space<smem>>
    %c0_131 = arith.constant 0 : index
    %c32_132 = arith.constant 32 : index
    %c0_133 = arith.constant 0 : index
    %c0_134 = arith.constant 0 : index
    %197 = vector.load %arg2[%c0_131, %c32_132, %c0_133, %c0_134] : memref<1x64x16x16xf32, #tpu.memory_space<vmem>>, vector<1x1x16x16xf32>
    %198 = vector.shape_cast %197 : vector<1x1x16x16xf32> to vector<16x16xf32>
    %199 = vector.broadcast %196 : f32 to vector<16x16xf32>
    %200 = arith.mulf %199, %198 : vector<16x16xf32>
    %201 = arith.addf %177, %200 : vector<16x16xf32>
    %c33 = arith.constant 33 : index
    %202 = memref.load %arg3[%c33] : memref<64xf32, #tpu.memory_space<smem>>
    %c0_135 = arith.constant 0 : index
    %c33_136 = arith.constant 33 : index
    %c0_137 = arith.constant 0 : index
    %c0_138 = arith.constant 0 : index
    %203 = vector.load %arg2[%c0_135, %c33_136, %c0_137, %c0_138] : memref<1x64x16x16xf32, #tpu.memory_space<vmem>>, vector<1x1x16x16xf32>
    %204 = vector.shape_cast %203 : vector<1x1x16x16xf32> to vector<16x16xf32>
    %205 = vector.broadcast %202 : f32 to vector<16x16xf32>
    %206 = arith.mulf %205, %204 : vector<16x16xf32>
    %207 = arith.addf %183, %206 : vector<16x16xf32>
    %c34 = arith.constant 34 : index
    %208 = memref.load %arg3[%c34] : memref<64xf32, #tpu.memory_space<smem>>
    %c0_139 = arith.constant 0 : index
    %c34_140 = arith.constant 34 : index
    %c0_141 = arith.constant 0 : index
    %c0_142 = arith.constant 0 : index
    %209 = vector.load %arg2[%c0_139, %c34_140, %c0_141, %c0_142] : memref<1x64x16x16xf32, #tpu.memory_space<vmem>>, vector<1x1x16x16xf32>
    %210 = vector.shape_cast %209 : vector<1x1x16x16xf32> to vector<16x16xf32>
    %211 = vector.broadcast %208 : f32 to vector<16x16xf32>
    %212 = arith.mulf %211, %210 : vector<16x16xf32>
    %213 = arith.addf %189, %212 : vector<16x16xf32>
    %c35 = arith.constant 35 : index
    %214 = memref.load %arg3[%c35] : memref<64xf32, #tpu.memory_space<smem>>
    %c0_143 = arith.constant 0 : index
    %c35_144 = arith.constant 35 : index
    %c0_145 = arith.constant 0 : index
    %c0_146 = arith.constant 0 : index
    %215 = vector.load %arg2[%c0_143, %c35_144, %c0_145, %c0_146] : memref<1x64x16x16xf32, #tpu.memory_space<vmem>>, vector<1x1x16x16xf32>
    %216 = vector.shape_cast %215 : vector<1x1x16x16xf32> to vector<16x16xf32>
    %217 = vector.broadcast %214 : f32 to vector<16x16xf32>
    %218 = arith.mulf %217, %216 : vector<16x16xf32>
    %219 = arith.addf %195, %218 : vector<16x16xf32>
    %c36 = arith.constant 36 : index
    %220 = memref.load %arg3[%c36] : memref<64xf32, #tpu.memory_space<smem>>
    %c0_147 = arith.constant 0 : index
    %c36_148 = arith.constant 36 : index
    %c0_149 = arith.constant 0 : index
    %c0_150 = arith.constant 0 : index
    %221 = vector.load %arg2[%c0_147, %c36_148, %c0_149, %c0_150] : memref<1x64x16x16xf32, #tpu.memory_space<vmem>>, vector<1x1x16x16xf32>
    %222 = vector.shape_cast %221 : vector<1x1x16x16xf32> to vector<16x16xf32>
    %223 = vector.broadcast %220 : f32 to vector<16x16xf32>
    %224 = arith.mulf %223, %222 : vector<16x16xf32>
    %225 = arith.addf %201, %224 : vector<16x16xf32>
    %c37 = arith.constant 37 : index
    %226 = memref.load %arg3[%c37] : memref<64xf32, #tpu.memory_space<smem>>
    %c0_151 = arith.constant 0 : index
    %c37_152 = arith.constant 37 : index
    %c0_153 = arith.constant 0 : index
    %c0_154 = arith.constant 0 : index
    %227 = vector.load %arg2[%c0_151, %c37_152, %c0_153, %c0_154] : memref<1x64x16x16xf32, #tpu.memory_space<vmem>>, vector<1x1x16x16xf32>
    %228 = vector.shape_cast %227 : vector<1x1x16x16xf32> to vector<16x16xf32>
    %229 = vector.broadcast %226 : f32 to vector<16x16xf32>
    %230 = arith.mulf %229, %228 : vector<16x16xf32>
    %231 = arith.addf %207, %230 : vector<16x16xf32>
    %c38 = arith.constant 38 : index
    %232 = memref.load %arg3[%c38] : memref<64xf32, #tpu.memory_space<smem>>
    %c0_155 = arith.constant 0 : index
    %c38_156 = arith.constant 38 : index
    %c0_157 = arith.constant 0 : index
    %c0_158 = arith.constant 0 : index
    %233 = vector.load %arg2[%c0_155, %c38_156, %c0_157, %c0_158] : memref<1x64x16x16xf32, #tpu.memory_space<vmem>>, vector<1x1x16x16xf32>
    %234 = vector.shape_cast %233 : vector<1x1x16x16xf32> to vector<16x16xf32>
    %235 = vector.broadcast %232 : f32 to vector<16x16xf32>
    %236 = arith.mulf %235, %234 : vector<16x16xf32>
    %237 = arith.addf %213, %236 : vector<16x16xf32>
    %c39 = arith.constant 39 : index
    %238 = memref.load %arg3[%c39] : memref<64xf32, #tpu.memory_space<smem>>
    %c0_159 = arith.constant 0 : index
    %c39_160 = arith.constant 39 : index
    %c0_161 = arith.constant 0 : index
    %c0_162 = arith.constant 0 : index
    %239 = vector.load %arg2[%c0_159, %c39_160, %c0_161, %c0_162] : memref<1x64x16x16xf32, #tpu.memory_space<vmem>>, vector<1x1x16x16xf32>
    %240 = vector.shape_cast %239 : vector<1x1x16x16xf32> to vector<16x16xf32>
    %241 = vector.broadcast %238 : f32 to vector<16x16xf32>
    %242 = arith.mulf %241, %240 : vector<16x16xf32>
    %243 = arith.addf %219, %242 : vector<16x16xf32>
    %c40 = arith.constant 40 : index
    %244 = memref.load %arg3[%c40] : memref<64xf32, #tpu.memory_space<smem>>
    %c0_163 = arith.constant 0 : index
    %c40_164 = arith.constant 40 : index
    %c0_165 = arith.constant 0 : index
    %c0_166 = arith.constant 0 : index
    %245 = vector.load %arg2[%c0_163, %c40_164, %c0_165, %c0_166] : memref<1x64x16x16xf32, #tpu.memory_space<vmem>>, vector<1x1x16x16xf32>
    %246 = vector.shape_cast %245 : vector<1x1x16x16xf32> to vector<16x16xf32>
    %247 = vector.broadcast %244 : f32 to vector<16x16xf32>
    %248 = arith.mulf %247, %246 : vector<16x16xf32>
    %249 = arith.addf %225, %248 : vector<16x16xf32>
    %c41 = arith.constant 41 : index
    %250 = memref.load %arg3[%c41] : memref<64xf32, #tpu.memory_space<smem>>
    %c0_167 = arith.constant 0 : index
    %c41_168 = arith.constant 41 : index
    %c0_169 = arith.constant 0 : index
    %c0_170 = arith.constant 0 : index
    %251 = vector.load %arg2[%c0_167, %c41_168, %c0_169, %c0_170] : memref<1x64x16x16xf32, #tpu.memory_space<vmem>>, vector<1x1x16x16xf32>
    %252 = vector.shape_cast %251 : vector<1x1x16x16xf32> to vector<16x16xf32>
    %253 = vector.broadcast %250 : f32 to vector<16x16xf32>
    %254 = arith.mulf %253, %252 : vector<16x16xf32>
    %255 = arith.addf %231, %254 : vector<16x16xf32>
    %c42 = arith.constant 42 : index
    %256 = memref.load %arg3[%c42] : memref<64xf32, #tpu.memory_space<smem>>
    %c0_171 = arith.constant 0 : index
    %c42_172 = arith.constant 42 : index
    %c0_173 = arith.constant 0 : index
    %c0_174 = arith.constant 0 : index
    %257 = vector.load %arg2[%c0_171, %c42_172, %c0_173, %c0_174] : memref<1x64x16x16xf32, #tpu.memory_space<vmem>>, vector<1x1x16x16xf32>
    %258 = vector.shape_cast %257 : vector<1x1x16x16xf32> to vector<16x16xf32>
    %259 = vector.broadcast %256 : f32 to vector<16x16xf32>
    %260 = arith.mulf %259, %258 : vector<16x16xf32>
    %261 = arith.addf %237, %260 : vector<16x16xf32>
    %c43 = arith.constant 43 : index
    %262 = memref.load %arg3[%c43] : memref<64xf32, #tpu.memory_space<smem>>
    %c0_175 = arith.constant 0 : index
    %c43_176 = arith.constant 43 : index
    %c0_177 = arith.constant 0 : index
    %c0_178 = arith.constant 0 : index
    %263 = vector.load %arg2[%c0_175, %c43_176, %c0_177, %c0_178] : memref<1x64x16x16xf32, #tpu.memory_space<vmem>>, vector<1x1x16x16xf32>
    %264 = vector.shape_cast %263 : vector<1x1x16x16xf32> to vector<16x16xf32>
    %265 = vector.broadcast %262 : f32 to vector<16x16xf32>
    %266 = arith.mulf %265, %264 : vector<16x16xf32>
    %267 = arith.addf %243, %266 : vector<16x16xf32>
    %c44 = arith.constant 44 : index
    %268 = memref.load %arg3[%c44] : memref<64xf32, #tpu.memory_space<smem>>
    %c0_179 = arith.constant 0 : index
    %c44_180 = arith.constant 44 : index
    %c0_181 = arith.constant 0 : index
    %c0_182 = arith.constant 0 : index
    %269 = vector.load %arg2[%c0_179, %c44_180, %c0_181, %c0_182] : memref<1x64x16x16xf32, #tpu.memory_space<vmem>>, vector<1x1x16x16xf32>
    %270 = vector.shape_cast %269 : vector<1x1x16x16xf32> to vector<16x16xf32>
    %271 = vector.broadcast %268 : f32 to vector<16x16xf32>
    %272 = arith.mulf %271, %270 : vector<16x16xf32>
    %273 = arith.addf %249, %272 : vector<16x16xf32>
    %c45 = arith.constant 45 : index
    %274 = memref.load %arg3[%c45] : memref<64xf32, #tpu.memory_space<smem>>
    %c0_183 = arith.constant 0 : index
    %c45_184 = arith.constant 45 : index
    %c0_185 = arith.constant 0 : index
    %c0_186 = arith.constant 0 : index
    %275 = vector.load %arg2[%c0_183, %c45_184, %c0_185, %c0_186] : memref<1x64x16x16xf32, #tpu.memory_space<vmem>>, vector<1x1x16x16xf32>
    %276 = vector.shape_cast %275 : vector<1x1x16x16xf32> to vector<16x16xf32>
    %277 = vector.broadcast %274 : f32 to vector<16x16xf32>
    %278 = arith.mulf %277, %276 : vector<16x16xf32>
    %279 = arith.addf %255, %278 : vector<16x16xf32>
    %c46 = arith.constant 46 : index
    %280 = memref.load %arg3[%c46] : memref<64xf32, #tpu.memory_space<smem>>
    %c0_187 = arith.constant 0 : index
    %c46_188 = arith.constant 46 : index
    %c0_189 = arith.constant 0 : index
    %c0_190 = arith.constant 0 : index
    %281 = vector.load %arg2[%c0_187, %c46_188, %c0_189, %c0_190] : memref<1x64x16x16xf32, #tpu.memory_space<vmem>>, vector<1x1x16x16xf32>
    %282 = vector.shape_cast %281 : vector<1x1x16x16xf32> to vector<16x16xf32>
    %283 = vector.broadcast %280 : f32 to vector<16x16xf32>
    %284 = arith.mulf %283, %282 : vector<16x16xf32>
    %285 = arith.addf %261, %284 : vector<16x16xf32>
    %c47 = arith.constant 47 : index
    %286 = memref.load %arg3[%c47] : memref<64xf32, #tpu.memory_space<smem>>
    %c0_191 = arith.constant 0 : index
    %c47_192 = arith.constant 47 : index
    %c0_193 = arith.constant 0 : index
    %c0_194 = arith.constant 0 : index
    %287 = vector.load %arg2[%c0_191, %c47_192, %c0_193, %c0_194] : memref<1x64x16x16xf32, #tpu.memory_space<vmem>>, vector<1x1x16x16xf32>
    %288 = vector.shape_cast %287 : vector<1x1x16x16xf32> to vector<16x16xf32>
    %289 = vector.broadcast %286 : f32 to vector<16x16xf32>
    %290 = arith.mulf %289, %288 : vector<16x16xf32>
    %291 = arith.addf %267, %290 : vector<16x16xf32>
    %c48 = arith.constant 48 : index
    %292 = memref.load %arg3[%c48] : memref<64xf32, #tpu.memory_space<smem>>
    %c0_195 = arith.constant 0 : index
    %c48_196 = arith.constant 48 : index
    %c0_197 = arith.constant 0 : index
    %c0_198 = arith.constant 0 : index
    %293 = vector.load %arg2[%c0_195, %c48_196, %c0_197, %c0_198] : memref<1x64x16x16xf32, #tpu.memory_space<vmem>>, vector<1x1x16x16xf32>
    %294 = vector.shape_cast %293 : vector<1x1x16x16xf32> to vector<16x16xf32>
    %295 = vector.broadcast %292 : f32 to vector<16x16xf32>
    %296 = arith.mulf %295, %294 : vector<16x16xf32>
    %297 = arith.addf %273, %296 : vector<16x16xf32>
    %c49 = arith.constant 49 : index
    %298 = memref.load %arg3[%c49] : memref<64xf32, #tpu.memory_space<smem>>
    %c0_199 = arith.constant 0 : index
    %c49_200 = arith.constant 49 : index
    %c0_201 = arith.constant 0 : index
    %c0_202 = arith.constant 0 : index
    %299 = vector.load %arg2[%c0_199, %c49_200, %c0_201, %c0_202] : memref<1x64x16x16xf32, #tpu.memory_space<vmem>>, vector<1x1x16x16xf32>
    %300 = vector.shape_cast %299 : vector<1x1x16x16xf32> to vector<16x16xf32>
    %301 = vector.broadcast %298 : f32 to vector<16x16xf32>
    %302 = arith.mulf %301, %300 : vector<16x16xf32>
    %303 = arith.addf %279, %302 : vector<16x16xf32>
    %c50 = arith.constant 50 : index
    %304 = memref.load %arg3[%c50] : memref<64xf32, #tpu.memory_space<smem>>
    %c0_203 = arith.constant 0 : index
    %c50_204 = arith.constant 50 : index
    %c0_205 = arith.constant 0 : index
    %c0_206 = arith.constant 0 : index
    %305 = vector.load %arg2[%c0_203, %c50_204, %c0_205, %c0_206] : memref<1x64x16x16xf32, #tpu.memory_space<vmem>>, vector<1x1x16x16xf32>
    %306 = vector.shape_cast %305 : vector<1x1x16x16xf32> to vector<16x16xf32>
    %307 = vector.broadcast %304 : f32 to vector<16x16xf32>
    %308 = arith.mulf %307, %306 : vector<16x16xf32>
    %309 = arith.addf %285, %308 : vector<16x16xf32>
    %c51 = arith.constant 51 : index
    %310 = memref.load %arg3[%c51] : memref<64xf32, #tpu.memory_space<smem>>
    %c0_207 = arith.constant 0 : index
    %c51_208 = arith.constant 51 : index
    %c0_209 = arith.constant 0 : index
    %c0_210 = arith.constant 0 : index
    %311 = vector.load %arg2[%c0_207, %c51_208, %c0_209, %c0_210] : memref<1x64x16x16xf32, #tpu.memory_space<vmem>>, vector<1x1x16x16xf32>
    %312 = vector.shape_cast %311 : vector<1x1x16x16xf32> to vector<16x16xf32>
    %313 = vector.broadcast %310 : f32 to vector<16x16xf32>
    %314 = arith.mulf %313, %312 : vector<16x16xf32>
    %315 = arith.addf %291, %314 : vector<16x16xf32>
    %c52 = arith.constant 52 : index
    %316 = memref.load %arg3[%c52] : memref<64xf32, #tpu.memory_space<smem>>
    %c0_211 = arith.constant 0 : index
    %c52_212 = arith.constant 52 : index
    %c0_213 = arith.constant 0 : index
    %c0_214 = arith.constant 0 : index
    %317 = vector.load %arg2[%c0_211, %c52_212, %c0_213, %c0_214] : memref<1x64x16x16xf32, #tpu.memory_space<vmem>>, vector<1x1x16x16xf32>
    %318 = vector.shape_cast %317 : vector<1x1x16x16xf32> to vector<16x16xf32>
    %319 = vector.broadcast %316 : f32 to vector<16x16xf32>
    %320 = arith.mulf %319, %318 : vector<16x16xf32>
    %321 = arith.addf %297, %320 : vector<16x16xf32>
    %c53 = arith.constant 53 : index
    %322 = memref.load %arg3[%c53] : memref<64xf32, #tpu.memory_space<smem>>
    %c0_215 = arith.constant 0 : index
    %c53_216 = arith.constant 53 : index
    %c0_217 = arith.constant 0 : index
    %c0_218 = arith.constant 0 : index
    %323 = vector.load %arg2[%c0_215, %c53_216, %c0_217, %c0_218] : memref<1x64x16x16xf32, #tpu.memory_space<vmem>>, vector<1x1x16x16xf32>
    %324 = vector.shape_cast %323 : vector<1x1x16x16xf32> to vector<16x16xf32>
    %325 = vector.broadcast %322 : f32 to vector<16x16xf32>
    %326 = arith.mulf %325, %324 : vector<16x16xf32>
    %327 = arith.addf %303, %326 : vector<16x16xf32>
    %c54 = arith.constant 54 : index
    %328 = memref.load %arg3[%c54] : memref<64xf32, #tpu.memory_space<smem>>
    %c0_219 = arith.constant 0 : index
    %c54_220 = arith.constant 54 : index
    %c0_221 = arith.constant 0 : index
    %c0_222 = arith.constant 0 : index
    %329 = vector.load %arg2[%c0_219, %c54_220, %c0_221, %c0_222] : memref<1x64x16x16xf32, #tpu.memory_space<vmem>>, vector<1x1x16x16xf32>
    %330 = vector.shape_cast %329 : vector<1x1x16x16xf32> to vector<16x16xf32>
    %331 = vector.broadcast %328 : f32 to vector<16x16xf32>
    %332 = arith.mulf %331, %330 : vector<16x16xf32>
    %333 = arith.addf %309, %332 : vector<16x16xf32>
    %c55 = arith.constant 55 : index
    %334 = memref.load %arg3[%c55] : memref<64xf32, #tpu.memory_space<smem>>
    %c0_223 = arith.constant 0 : index
    %c55_224 = arith.constant 55 : index
    %c0_225 = arith.constant 0 : index
    %c0_226 = arith.constant 0 : index
    %335 = vector.load %arg2[%c0_223, %c55_224, %c0_225, %c0_226] : memref<1x64x16x16xf32, #tpu.memory_space<vmem>>, vector<1x1x16x16xf32>
    %336 = vector.shape_cast %335 : vector<1x1x16x16xf32> to vector<16x16xf32>
    %337 = vector.broadcast %334 : f32 to vector<16x16xf32>
    %338 = arith.mulf %337, %336 : vector<16x16xf32>
    %339 = arith.addf %315, %338 : vector<16x16xf32>
    %c56 = arith.constant 56 : index
    %340 = memref.load %arg3[%c56] : memref<64xf32, #tpu.memory_space<smem>>
    %c0_227 = arith.constant 0 : index
    %c56_228 = arith.constant 56 : index
    %c0_229 = arith.constant 0 : index
    %c0_230 = arith.constant 0 : index
    %341 = vector.load %arg2[%c0_227, %c56_228, %c0_229, %c0_230] : memref<1x64x16x16xf32, #tpu.memory_space<vmem>>, vector<1x1x16x16xf32>
    %342 = vector.shape_cast %341 : vector<1x1x16x16xf32> to vector<16x16xf32>
    %343 = vector.broadcast %340 : f32 to vector<16x16xf32>
    %344 = arith.mulf %343, %342 : vector<16x16xf32>
    %345 = arith.addf %321, %344 : vector<16x16xf32>
    %c57 = arith.constant 57 : index
    %346 = memref.load %arg3[%c57] : memref<64xf32, #tpu.memory_space<smem>>
    %c0_231 = arith.constant 0 : index
    %c57_232 = arith.constant 57 : index
    %c0_233 = arith.constant 0 : index
    %c0_234 = arith.constant 0 : index
    %347 = vector.load %arg2[%c0_231, %c57_232, %c0_233, %c0_234] : memref<1x64x16x16xf32, #tpu.memory_space<vmem>>, vector<1x1x16x16xf32>
    %348 = vector.shape_cast %347 : vector<1x1x16x16xf32> to vector<16x16xf32>
    %349 = vector.broadcast %346 : f32 to vector<16x16xf32>
    %350 = arith.mulf %349, %348 : vector<16x16xf32>
    %351 = arith.addf %327, %350 : vector<16x16xf32>
    %c58 = arith.constant 58 : index
    %352 = memref.load %arg3[%c58] : memref<64xf32, #tpu.memory_space<smem>>
    %c0_235 = arith.constant 0 : index
    %c58_236 = arith.constant 58 : index
    %c0_237 = arith.constant 0 : index
    %c0_238 = arith.constant 0 : index
    %353 = vector.load %arg2[%c0_235, %c58_236, %c0_237, %c0_238] : memref<1x64x16x16xf32, #tpu.memory_space<vmem>>, vector<1x1x16x16xf32>
    %354 = vector.shape_cast %353 : vector<1x1x16x16xf32> to vector<16x16xf32>
    %355 = vector.broadcast %352 : f32 to vector<16x16xf32>
    %356 = arith.mulf %355, %354 : vector<16x16xf32>
    %357 = arith.addf %333, %356 : vector<16x16xf32>
    %c59 = arith.constant 59 : index
    %358 = memref.load %arg3[%c59] : memref<64xf32, #tpu.memory_space<smem>>
    %c0_239 = arith.constant 0 : index
    %c59_240 = arith.constant 59 : index
    %c0_241 = arith.constant 0 : index
    %c0_242 = arith.constant 0 : index
    %359 = vector.load %arg2[%c0_239, %c59_240, %c0_241, %c0_242] : memref<1x64x16x16xf32, #tpu.memory_space<vmem>>, vector<1x1x16x16xf32>
    %360 = vector.shape_cast %359 : vector<1x1x16x16xf32> to vector<16x16xf32>
    %361 = vector.broadcast %358 : f32 to vector<16x16xf32>
    %362 = arith.mulf %361, %360 : vector<16x16xf32>
    %363 = arith.addf %339, %362 : vector<16x16xf32>
    %c60 = arith.constant 60 : index
    %364 = memref.load %arg3[%c60] : memref<64xf32, #tpu.memory_space<smem>>
    %c0_243 = arith.constant 0 : index
    %c60_244 = arith.constant 60 : index
    %c0_245 = arith.constant 0 : index
    %c0_246 = arith.constant 0 : index
    %365 = vector.load %arg2[%c0_243, %c60_244, %c0_245, %c0_246] : memref<1x64x16x16xf32, #tpu.memory_space<vmem>>, vector<1x1x16x16xf32>
    %366 = vector.shape_cast %365 : vector<1x1x16x16xf32> to vector<16x16xf32>
    %367 = vector.broadcast %364 : f32 to vector<16x16xf32>
    %368 = arith.mulf %367, %366 : vector<16x16xf32>
    %369 = arith.addf %345, %368 : vector<16x16xf32>
    %c61 = arith.constant 61 : index
    %370 = memref.load %arg3[%c61] : memref<64xf32, #tpu.memory_space<smem>>
    %c0_247 = arith.constant 0 : index
    %c61_248 = arith.constant 61 : index
    %c0_249 = arith.constant 0 : index
    %c0_250 = arith.constant 0 : index
    %371 = vector.load %arg2[%c0_247, %c61_248, %c0_249, %c0_250] : memref<1x64x16x16xf32, #tpu.memory_space<vmem>>, vector<1x1x16x16xf32>
    %372 = vector.shape_cast %371 : vector<1x1x16x16xf32> to vector<16x16xf32>
    %373 = vector.broadcast %370 : f32 to vector<16x16xf32>
    %374 = arith.mulf %373, %372 : vector<16x16xf32>
    %375 = arith.addf %351, %374 : vector<16x16xf32>
    %c62 = arith.constant 62 : index
    %376 = memref.load %arg3[%c62] : memref<64xf32, #tpu.memory_space<smem>>
    %c0_251 = arith.constant 0 : index
    %c62_252 = arith.constant 62 : index
    %c0_253 = arith.constant 0 : index
    %c0_254 = arith.constant 0 : index
    %377 = vector.load %arg2[%c0_251, %c62_252, %c0_253, %c0_254] : memref<1x64x16x16xf32, #tpu.memory_space<vmem>>, vector<1x1x16x16xf32>
    %378 = vector.shape_cast %377 : vector<1x1x16x16xf32> to vector<16x16xf32>
    %379 = vector.broadcast %376 : f32 to vector<16x16xf32>
    %380 = arith.mulf %379, %378 : vector<16x16xf32>
    %381 = arith.addf %357, %380 : vector<16x16xf32>
    %c63 = arith.constant 63 : index
    %382 = memref.load %arg3[%c63] : memref<64xf32, #tpu.memory_space<smem>>
    %c0_255 = arith.constant 0 : index
    %c63_256 = arith.constant 63 : index
    %c0_257 = arith.constant 0 : index
    %c0_258 = arith.constant 0 : index
    %383 = vector.load %arg2[%c0_255, %c63_256, %c0_257, %c0_258] : memref<1x64x16x16xf32, #tpu.memory_space<vmem>>, vector<1x1x16x16xf32>
    %384 = vector.shape_cast %383 : vector<1x1x16x16xf32> to vector<16x16xf32>
    %385 = vector.broadcast %382 : f32 to vector<16x16xf32>
    %386 = arith.mulf %385, %384 : vector<16x16xf32>
    %387 = arith.addf %363, %386 : vector<16x16xf32>
    %388 = arith.addf %369, %375 : vector<16x16xf32>
    %389 = arith.addf %388, %381 : vector<16x16xf32>
    %390 = arith.addf %389, %387 : vector<16x16xf32>
    %c0_259 = arith.constant 0 : index
    %391 = memref.load %arg4[%c0_259] : memref<1xf32, #tpu.memory_space<smem>>
    %392 = vector.broadcast %391 : f32 to vector<16x16xf32>
    %393 = arith.addf %390, %392 : vector<16x16xf32>
    %394 = vector.shape_cast %393 : vector<16x16xf32> to vector<1x1x16x16xf32>
    %c0_260 = arith.constant 0 : index
    %c0_261 = arith.constant 0 : index
    %c0_262 = arith.constant 0 : index
    %c0_263 = arith.constant 0 : index
    %395 = vector.load %arg5[%c0_260, %c0_261, %c0_262, %c0_263] : memref<1x1x16x16xf32, #tpu.memory_space<vmem>>, vector<1x1x16x16xf32>
    tpu.vector_store %arg5[%c0_260, %c0_261, %c0_262, %c0_263], %394 {strides = array<i32>} : memref<1x1x16x16xf32, #tpu.memory_space<vmem>>, vector<1x1x16x16xf32>,
    return
  }
  func.func @transform_0(%arg0: i32, %arg1: i32) -> (i32, i32, i32, i32) {
    %c0_i32 = arith.constant 0 : i32
    %c0_i32_0 = arith.constant 0 : i32
    %c0_i32_1 = arith.constant 0 : i32
    return %arg0, %c0_i32, %arg1, %c0_i32_0 : i32, i32, i32, i32
  }
  func.func @transform_1(%arg0: i32, %arg1: i32) -> i32 {
    %c0_i32 = arith.constant 0 : i32
    %c0_i32_0 = arith.constant 0 : i32
    return %c0_i32 : i32
  }
  func.func @transform_2(%arg0: i32, %arg1: i32) -> i32 {
    %c0_i32 = arith.constant 0 : i32
    %c0_i32_0 = arith.constant 0 : i32
    return %c0_i32 : i32
  }
  func.func @transform_3(%arg0: i32, %arg1: i32) -> (i32, i32, i32, i32) {
    %c0_i32 = arith.constant 0 : i32
    %c0_i32_0 = arith.constant 0 : i32
    %c0_i32_1 = arith.constant 0 : i32
    return %arg0, %c0_i32, %arg1, %c0_i32_0 : i32, i32, i32, i32
  }
}

</mosaic_0001>

<llo_original>
// kernel: _score_layer_impl.1
$region0: #{_score_layer_impl.1}
  #allocation0 [shape = 'u32[]', space=smem, size = 0x4, offset = 0x4, fixed_abs, tag = 'smem constant byte address 0x4 - core index']
  #allocation1 [shape = 'u32[144,128]{1,0:T(1,128)}', space=vmem, size = 0x12000, scoped, tag = 'internal scratch']
  #allocation2 [shape = 'f32[1]{0:T(128)S(6)}', space=smem, size = 0x200, scoped, tag = 'scoped memory for _score_layer_impl.1']
  %s0 = inlined_call_operand.vmem [shape: f32[2,64,16,16], index: 0, kind: input, shape index: {}]
  %s1 = inlined_call_operand.vmem [shape: f32[64], index: 1, kind: input, shape index: {}]
  %s2 = inlined_call_operand.<no memory space> [shape: f32[1], index: 2, kind: input, shape index: {}]
  %s3 = inlined_call_operand.hbm [shape: f32[2,1,16,16], index: 3, kind: output, shape index: {}]
  %s4 = sld [smem:[#allocation0]]
  $region49: #{_score_layer_impl.1} parent=0
    _
  %s6 = ssub.s32 1, %s4
  %s7 = scalar_select 0, %s6, %s4
  %8 = sst [smem:[#allocation2]] %s2
  $region1: #{_score_layer_impl.1} parent=0
    #allocation3 [shape = 'u8[512]{0}', space=smem, size = 0x200, scoped, tag = 'input window, operand 1, single buffered']
    #allocation4 [shape = 's32[2]{0}', space=sflag, size = 0x8, scoped, tag = 'scoped memory for _score_layer_impl.1']
    #allocation5 [shape = 's32[2]{0}', space=sflag, size = 0x8, scoped, tag = 'scoped memory for _score_layer_impl.1']
    #allocation6 [shape = 'u8[16384]{0}', space=vmem, size = 0x4000, scoped, tag = 'output window, operand 0']
    %9 = vsyncpa [#allocation5], 0
    %10 = vsyncpa [#allocation4], 0
    %s11 = scalar_lea.sflag [#allocation4], 1
    %12 = vsyncpa %s11, 0
    loop: start=0, step=1, limit=4
    $region2: #{_score_layer_impl.1} parent=1 // loop_pre_header
      _
    $region3: #{_score_layer_impl.1} parent=1 // loop_header
      %s14 = sphi 0, %s18
      %p15 = scmp.ge.s32.totalorder %s14, 4
      %s21 = sphi 0, %s33
      %s22 = sphi 0, %s29
      %s23 = sphi 0, %s21
      %s24 = sphi 0, %s22
      %s25 = sphi 0, %s23
      %s26 = sphi 0, %s24
      %s38 = sphi 0, %s40
      %s41 = sphi 0, %s38
      %s42 = sphi 0, %s41
      %s58 = sphi 0, %s42
      %s62 = sphi 0, %s62
      %s64 = sphi 0, %s62
      %s65 = sphi 0, %s64
      %s79 = sphi 0, %s65
      %s83 = sphi 0, %s83
      %s85 = sphi 0, %s83
      %s86 = sphi 0, %s85
      %s100 = sphi 0, %s86
      %s108 = sphi 0, %s110
      %s111 = sphi 0, %s108
      %s112 = sphi 0, %s111
      %s128 = sphi 0, %s112
    $region4: #{_score_layer_impl.1} parent=1 // loop_header_branch
      %17 = sbr.rel (%p15) target = $region8
    $region5: #{_score_layer_impl.1} parent=1 // loop_body
      %s19 = ssub.s32 %s14, 1
      %s20 = ssub.s32 %s14, 2
      %s27 = sadd.s32 1, %s22
      %p28 = scmp.ge.s32.totalorder %s27, 1
      %s29 = scalar_select %p28, 0, %s27
      %s30 = sadd.s32 1, %s21
      %s31 = scalar_select %p28, %s30, %s21
      %p32 = scmp.ge.s32.totalorder %s31, 2
      %s33 = scalar_select %p32, 0, %s31
      %s34 = ssub.s32 %s21, %s33
      %s35 = ssub.s32 %s22, %s29
      %s36 = sor.u32 %s34, %s35
      %p37 = scmp.eq.s32.totalorder %s36, 0
      %s39 = sadd.s32 %s38, 1
      %s40 = scalar_select %p37, %s38, %s39
      %p43 = pneg %p37
      %p44 = scmp.eq.s32.totalorder %s14, 1
      %p45 = por %p43, %p44
      %p46 = scmp.ne.s32.totalorder %s38, %s41
      %p47 = scmp.eq.s32.totalorder %s14, 0
      %p48 = por %p46, %p47
      %p49 = scmp.ne.s32.totalorder %s38, %s41
      %p50 = scmp.eq.s32.totalorder %s19, 1
      %p51 = por %p49, %p50
      %p52 = scmp.ne.s32.totalorder %s41, %s42
      %p53 = scmp.eq.s32.totalorder %s19, 0
      %p54 = por %p52, %p53
      %p55 = scmp.ne.s32.totalorder %s41, %s42
      %p56 = scmp.eq.s32.totalorder %s20, 1
      %p57 = por %p55, %p56
      %p59 = scmp.ne.s32.totalorder %s42, %s58
      %p60 = scmp.eq.s32.totalorder %s20, 0
      %p61 = por %p59, %p60
      %s63 = sadd.s32 %s62, 1
      %p66 = scmp.eq.s32.totalorder %s14, 1
      %p67 = scmp.ne.s32.totalorder %s62, %s64
      %p68 = scmp.eq.s32.totalorder %s14, 0
      %p69 = por %p67, %p68
      %p70 = scmp.ne.s32.totalorder %s62, %s64
      %p71 = scmp.eq.s32.totalorder %s19, 1
      %p72 = por %p70, %p71
      %p73 = scmp.ne.s32.totalorder %s64, %s65
      %p74 = scmp.eq.s32.totalorder %s19, 0
      %p75 = por %p73, %p74
      %p76 = scmp.ne.s32.totalorder %s64, %s65
      %p77 = scmp.eq.s32.totalorder %s20, 1
      %p78 = por %p76, %p77
      %p80 = scmp.ne.s32.totalorder %s65, %s79
      %p81 = scmp.eq.s32.totalorder %s20, 0
      %p82 = por %p80, %p81
      %s84 = sadd.s32 %s83, 1
      %p87 = scmp.eq.s32.totalorder %s14, 1
      %p88 = scmp.ne.s32.totalorder %s83, %s85
      %p89 = scmp.eq.s32.totalorder %s14, 0
      %p90 = por %p88, %p89
      %p91 = scmp.ne.s32.totalorder %s83, %s85
      %p92 = scmp.eq.s32.totalorder %s19, 1
      %p93 = por %p91, %p92
      %p94 = scmp.ne.s32.totalorder %s85, %s86
      %p95 = scmp.eq.s32.totalorder %s19, 0
      %p96 = por %p94, %p95
      %p97 = scmp.ne.s32.totalorder %s85, %s86
      %p98 = scmp.eq.s32.totalorder %s20, 1
      %p99 = por %p97, %p98
      %p101 = scmp.ne.s32.totalorder %s86, %s100
      %p102 = scmp.eq.s32.totalorder %s20, 0
      %p103 = por %p101, %p102
      %s104 = ssub.s32 %s21, %s33
      %s105 = ssub.s32 %s22, %s29
      %s106 = sor.u32 %s104, %s105
      %p107 = scmp.eq.s32.totalorder %s106, 0
      %s109 = sadd.s32 %s108, 1
      %s110 = scalar_select %p107, %s108, %s109
      %p113 = pneg %p107
      %p114 = scmp.eq.s32.totalorder %s14, 1
      %p115 = por %p113, %p114
      %p116 = scmp.ne.s32.totalorder %s108, %s111
      %p117 = scmp.eq.s32.totalorder %s14, 0
      %p118 = por %p116, %p117
      %p119 = scmp.ne.s32.totalorder %s108, %s111
      %p120 = scmp.eq.s32.totalorder %s19, 1
      %p121 = por %p119, %p120
      %p122 = scmp.ne.s32.totalorder %s111, %s112
      %p123 = scmp.eq.s32.totalorder %s19, 0
      %p124 = por %p122, %p123
      %p125 = scmp.ne.s32.totalorder %s111, %s112
      %p126 = scmp.eq.s32.totalorder %s20, 1
      %p127 = por %p125, %p126
      %p129 = scmp.ne.s32.totalorder %s112, %s128
      %p130 = scmp.eq.s32.totalorder %s20, 0
      %p131 = por %p129, %p130
      %p132 = scmp.le.s32.totalorder 1, %s14
      %p133 = scmp.lt.s32.totalorder %s14, 3
      %p134 = pnand %p132, %p133
      %p135 = pneg %p134
      // Predicated region
      $region9: #{_score_layer_impl.1} parent=5 // pred_check
        _
      $region10: #{_score_layer_impl.1} parent=5 // pred_check_branch
        %137 = sbr.rel (%p134) target = $region12
      $region11: #{_score_layer_impl.1} parent=5 // pred_region
        %s138 = ssub.s32 %s14, 1
        // Predicated region
        $region13: #{_score_layer_impl.1} parent=11 // pred_check
          %p139 = pneg %p75
        $region14: #{_score_layer_impl.1} parent=11 // pred_check_branch
          %141 = sbr.rel (%p139) target = $region16
        $region15: #{_score_layer_impl.1} parent=11 // pred_region
          %s143 = ssub.s32 16, 16
          %144 = vsyncadd [#allocation5], %s143
          %s146 = sshll.u32 %s1, 4
          %s147 = int_to_ptr.vmem [resolvable:$true] %s146
          %149 = dma.vmem_to_smem %s147, 16, [#allocation3], [#allocation5]
        $region16: #{_score_layer_impl.1} parent=11 // pred_fallthru
          _
        // Predicated region
        $region17: #{_score_layer_impl.1} parent=11 // pred_check
          %p150 = pneg %p96
        $region18: #{_score_layer_impl.1} parent=11 // pred_check_branch
          %152 = sbr.rel (%p150) target = $region20
        $region19: #{_score_layer_impl.1} parent=11 // pred_region
          _
        $region20: #{_score_layer_impl.1} parent=11 // pred_fallthru
          _
      $region12: #{_score_layer_impl.1} parent=5 // pred_fallthru
        _
      %p153 = scmp.lt.s32.totalorder %s14, 2
      // Predicated region
      $region21: #{_score_layer_impl.1} parent=5 // pred_check
        %p154 = pneg %p153
      $region22: #{_score_layer_impl.1} parent=5 // pred_check_branch
        %156 = sbr.rel (%p154) target = $region24
      $region23: #{_score_layer_impl.1} parent=5 // pred_region
        // Predicated region
        $region25: #{_score_layer_impl.1} parent=23 // pred_check
          %p157 = pneg %p48
        $region26: #{_score_layer_impl.1} parent=23 // pred_check_branch
          %159 = sbr.rel (%p157) target = $region28
        $region27: #{_score_layer_impl.1} parent=23 // pred_region
          %s160 = smul.u32 2, %s22
          %p161 = scmp.lt.s32.totalorder %s21, 1
          %s162 = scalar_select %p161, %s21, 1
          %p163 = scmp.lt.s32.totalorder %s160, 1
          %s164 = scalar_select %p163, %s160, 1
          %s165 = smul.addr %s162, 128
          %s166 = sadd.s32 %s164, %s165
          %s167 = smul.addr %s166, 8
          %s168 = scalar_lea.vmem %s0, %s167
          %s169 = smul.u32 2, %s22
        $region28: #{_score_layer_impl.1} parent=23 // pred_fallthru
          _
      $region24: #{_score_layer_impl.1} parent=5 // pred_fallthru
        _
      %p170 = scmp.le.s32.totalorder 1, %s14
      %p171 = scmp.lt.s32.totalorder %s14, 3
      %p172 = pnand %p170, %p171
      %p173 = pneg %p172
      // Predicated region
      $region29: #{_score_layer_impl.1} parent=5 // pred_check
        _
      $region30: #{_score_layer_impl.1} parent=5 // pred_check_branch
        %175 = sbr.rel (%p172) target = $region32
      $region31: #{_score_layer_impl.1} parent=5 // pred_region
        %s176 = ssub.s32 %s14, 1
        // Predicated region
        $region33: #{_score_layer_impl.1} parent=31 // pred_check
          %p177 = pneg %p75
        $region34: #{_score_layer_impl.1} parent=31 // pred_check_branch
          %179 = sbr.rel (%p177) target = $region36
        $region35: #{_score_layer_impl.1} parent=31 // pred_region
          %180 = dma.done [#allocation5], 16
        $region36: #{_score_layer_impl.1} parent=31 // pred_fallthru
          _
        %181 = sfence
        %s182 = smul.u32 2, %s24
        %p183 = scmp.lt.s32.totalorder %s23, 1
        %s184 = scalar_select %p183, %s23, 1
        %p185 = scmp.lt.s32.totalorder %s182, 1
        %s186 = scalar_select %p185, %s182, 1
        %s187 = smul.addr %s184, 128
        %s188 = sadd.s32 %s186, %s187
        %s189 = smul.addr %s188, 8
        %s190 = scalar_lea.vmem %s0, %s189
        %p191 = pneg %p54
        %p192 = pneg %p51
        %p193 = pneg %p75
        %p194 = pneg %p72
        %p195 = pneg %p96
        %p196 = pneg %p93
        %p197 = pneg %p124
        %p198 = pneg %p121
        %s199 = sand.u32 %s111, 1
        %s200 = scalar_lea.sflag [#allocation4], %s199
        %s201 = sand.u32 %s111, 1
        %s202 = smul.addr %s201, 16
        %s203 = scalar_lea.vmem [#allocation6], %s202
        %s204 = smul.u32 2, %s24
        %p205 = scmp.lt.s32.totalorder %s23, 1
        %s206 = scalar_select %p205, %s23, 1
        %p207 = scmp.lt.s32.totalorder %s204, 1
        %s208 = scalar_select %p207, %s204, 1
        %s209 = smul.addr %s206, 128
        %s210 = sadd.s32 %s208, %s209
        %s211 = smul.addr %s210, 8
        %s212 = scalar_lea.vmem %s0, %s211
        %s213 = smul.u32 2, %s24
        %s214 = smul.u32 2, %s24
        %s215 = sld [smem:[#allocation3]]
        %v216 = vld [vmem:[%s212] sm:$0xff]
        %v217 = vld [vmem:[%s212 + $0x8] sm:$0xff]
        %v218 = vstv %s215
        %v219 = vmul.f32 %v218, %v216
        %v220 = vmul.f32 %v218, %v217
        %v221 = vadd.f32 %v219, 0.0
        %v222 = vadd.f32 %v220, 0.0
        %s223 = sld [smem:[#allocation3 + $0x1]]
        %s224 = scalar_lea.vmem %s212, 16
        %v225 = vld [vmem:[%s224] sm:$0xff]
        %v226 = vld [vmem:[%s224 + $0x8] sm:$0xff]
        %v227 = vstv %s223
        %v228 = vmul.f32 %v227, %v225
        %v229 = vmul.f32 %v227, %v226
        %v230 = vadd.f32 %v228, 0.0
        %v231 = vadd.f32 %v229, 0.0
        %s232 = sld [smem:[#allocation3 + $0x2]]
        %s233 = scalar_lea.vmem %s212, 32
        %v234 = vld [vmem:[%s233] sm:$0xff]
        %v235 = vld [vmem:[%s233 + $0x8] sm:$0xff]
        %v236 = vstv %s232
        %v237 = vmul.f32 %v236, %v234
        %v238 = vmul.f32 %v236, %v235
        %v239 = vadd.f32 %v237, 0.0
        %v240 = vadd.f32 %v238, 0.0
        %s241 = sld [smem:[#allocation3 + $0x3]]
        %s242 = scalar_lea.vmem %s212, 48
        %v243 = vld [vmem:[%s242] sm:$0xff]
        %v244 = vld [vmem:[%s242 + $0x8] sm:$0xff]
        %v245 = vstv %s241
        %v246 = vmul.f32 %v245, %v243
        %v247 = vmul.f32 %v245, %v244
        %v248 = vadd.f32 %v246, 0.0
        %v249 = vadd.f32 %v247, 0.0
        %s250 = sld [smem:[#allocation3 + $0x4]]
        %s251 = scalar_lea.vmem %s212, 64
        %v252 = vld [vmem:[%s251] sm:$0xff]
        %v253 = vld [vmem:[%s251 + $0x8] sm:$0xff]
        %v254 = vstv %s250
        %v255 = vmul.f32 %v254, %v252
        %v256 = vmul.f32 %v254, %v253
        %v257 = vadd.f32 %v221, %v255
        %v258 = vadd.f32 %v222, %v256
        %s259 = sld [smem:[#allocation3 + $0x5]]
        %s260 = scalar_lea.vmem %s212, 80
        %v261 = vld [vmem:[%s260] sm:$0xff]
        %v262 = vld [vmem:[%s260 + $0x8] sm:$0xff]
        %v263 = vstv %s259
        %v264 = vmul.f32 %v263, %v261
        %v265 = vmul.f32 %v263, %v262
        %v266 = vadd.f32 %v230, %v264
        %v267 = vadd.f32 %v231, %v265
        %s268 = sld [smem:[#allocation3 + $0x6]]
        %s269 = scalar_lea.vmem %s212, 96
        %v270 = vld [vmem:[%s269] sm:$0xff]
        %v271 = vld [vmem:[%s269 + $0x8] sm:$0xff]
        %v272 = vstv %s268
        %v273 = vmul.f32 %v272, %v270
        %v274 = vmul.f32 %v272, %v271
        %v275 = vadd.f32 %v239, %v273
        %v276 = vadd.f32 %v240, %v274
        %s277 = sld [smem:[#allocation3 + $0x7]]
        %s278 = scalar_lea.vmem %s212, 112
        %v279 = vld [vmem:[%s278] sm:$0xff]
        %v280 = vld [vmem:[%s278 + $0x8] sm:$0xff]
        %v281 = vstv %s277
        %v282 = vmul.f32 %v281, %v279
        %v283 = vmul.f32 %v281, %v280
        %v284 = vadd.f32 %v248, %v282
        %v285 = vadd.f32 %v249, %v283
        %s286 = sld [smem:[#allocation3 + $0x8]]
        %s287 = scalar_lea.vmem %s212, 128
        %v288 = vld [vmem:[%s287] sm:$0xff]
        %v289 = vld [vmem:[%s287 + $0x8] sm:$0xff]
        %v290 = vstv %s286
        %v291 = vmul.f32 %v290, %v288
        %v292 = vmul.f32 %v290, %v289
        %v293 = vadd.f32 %v257, %v291
        %v294 = vadd.f32 %v258, %v292
        %s295 = sld [smem:[#allocation3 + $0x9]]
        %s296 = scalar_lea.vmem %s212, 144
        %v297 = vld [vmem:[%s296] sm:$0xff]
        %v298 = vld [vmem:[%s296 + $0x8] sm:$0xff]
        %v299 = vstv %s295
        %v300 = vmul.f32 %v299, %v297
        %v301 = vmul.f32 %v299, %v298
        %v302 = vadd.f32 %v266, %v300
        %v303 = vadd.f32 %v267, %v301
        %s304 = sld [smem:[#allocation3 + $0xa]]
        %s305 = scalar_lea.vmem %s212, 160
        %v306 = vld [vmem:[%s305] sm:$0xff]
        %v307 = vld [vmem:[%s305 + $0x8] sm:$0xff]
        %v308 = vstv %s304
        %v309 = vmul.f32 %v308, %v306
        %v310 = vmul.f32 %v308, %v307
        %v311 = vadd.f32 %v275, %v309
        %v312 = vadd.f32 %v276, %v310
        %s313 = sld [smem:[#allocation3 + $0xb]]
        %s314 = scalar_lea.vmem %s212, 176
        %v315 = vld [vmem:[%s314] sm:$0xff]
        %v316 = vld [vmem:[%s314 + $0x8] sm:$0xff]
        %v317 = vstv %s313
        %v318 = vmul.f32 %v317, %v315
        %v319 = vmul.f32 %v317, %v316
        %v320 = vadd.f32 %v284, %v318
        %v321 = vadd.f32 %v285, %v319
        %s322 = sld [smem:[#allocation3 + $0xc]]
        %s323 = scalar_lea.vmem %s212, 192
        %v324 = vld [vmem:[%s323] sm:$0xff]
        %v325 = vld [vmem:[%s323 + $0x8] sm:$0xff]
        %v326 = vstv %s322
        %v327 = vmul.f32 %v326, %v324
        %v328 = vmul.f32 %v326, %v325
        %v329 = vadd.f32 %v293, %v327
        %v330 = vadd.f32 %v294, %v328
        %s331 = sld [smem:[#allocation3 + $0xd]]
        %s332 = scalar_lea.vmem %s212, 208
        %v333 = vld [vmem:[%s332] sm:$0xff]
        %v334 = vld [vmem:[%s332 + $0x8] sm:$0xff]
        %v335 = vstv %s331
        %v336 = vmul.f32 %v335, %v333
        %v337 = vmul.f32 %v335, %v334
        %v338 = vadd.f32 %v302, %v336
        %v339 = vadd.f32 %v303, %v337
        %s340 = sld [smem:[#allocation3 + $0xe]]
        %s341 = scalar_lea.vmem %s212, 224
        %v342 = vld [vmem:[%s341] sm:$0xff]
        %v343 = vld [vmem:[%s341 + $0x8] sm:$0xff]
        %v344 = vstv %s340
        %v345 = vmul.f32 %v344, %v342
        %v346 = vmul.f32 %v344, %v343
        %v347 = vadd.f32 %v311, %v345
        %v348 = vadd.f32 %v312, %v346
        %s349 = sld [smem:[#allocation3 + $0xf]]
        %s350 = scalar_lea.vmem %s212, 240
        %v351 = vld [vmem:[%s350] sm:$0xff]
        %v352 = vld [vmem:[%s350 + $0x8] sm:$0xff]
        %v353 = vstv %s349
        %v354 = vmul.f32 %v353, %v351
        %v355 = vmul.f32 %v353, %v352
        %v356 = vadd.f32 %v320, %v354
        %v357 = vadd.f32 %v321, %v355
        %s358 = sld [smem:[#allocation3 + $0x10]]
        %s359 = scalar_lea.vmem %s212, 256
        %v360 = vld [vmem:[%s359] sm:$0xff]
        %v361 = vld [vmem:[%s359 + $0x8] sm:$0xff]
        %v362 = vstv %s358
        %v363 = vmul.f32 %v362, %v360
        %v364 = vmul.f32 %v362, %v361
        %v365 = vadd.f32 %v329, %v363
        %v366 = vadd.f32 %v330, %v364
        %s367 = sld [smem:[#allocation3 + $0x11]]
        %s368 = scalar_lea.vmem %s212, 272
        %v369 = vld [vmem:[%s368] sm:$0xff]
        %v370 = vld [vmem:[%s368 + $0x8] sm:$0xff]
        %v371 = vstv %s367
        %v372 = vmul.f32 %v371, %v369
        %v373 = vmul.f32 %v371, %v370
        %v374 = vadd.f32 %v338, %v372
        %v375 = vadd.f32 %v339, %v373
        %s376 = sld [smem:[#allocation3 + $0x12]]
        %s377 = scalar_lea.vmem %s212, 288
        %v378 = vld [vmem:[%s377] sm:$0xff]
        %v379 = vld [vmem:[%s377 + $0x8] sm:$0xff]
        %v380 = vstv %s376
        %v381 = vmul.f32 %v380, %v378
        %v382 = vmul.f32 %v380, %v379
        %v383 = vadd.f32 %v347, %v381
        %v384 = vadd.f32 %v348, %v382
        %s385 = sld [smem:[#allocation3 + $0x13]]
        %s386 = scalar_lea.vmem %s212, 304
        %v387 = vld [vmem:[%s386] sm:$0xff]
        %v388 = vld [vmem:[%s386 + $0x8] sm:$0xff]
        %v389 = vstv %s385
        %v390 = vmul.f32 %v389, %v387
        %v391 = vmul.f32 %v389, %v388
        %v392 = vadd.f32 %v356, %v390
        %v393 = vadd.f32 %v357, %v391
        %s394 = sld [smem:[#allocation3 + $0x14]]
        %s395 = scalar_lea.vmem %s212, 320
        %v396 = vld [vmem:[%s395] sm:$0xff]
        %v397 = vld [vmem:[%s395 + $0x8] sm:$0xff]
        %v398 = vstv %s394
        %v399 = vmul.f32 %v398, %v396
        %v400 = vmul.f32 %v398, %v397
        %v401 = vadd.f32 %v365, %v399
        %v402 = vadd.f32 %v366, %v400
        %s403 = sld [smem:[#allocation3 + $0x15]]
        %s404 = scalar_lea.vmem %s212, 336
        %v405 = vld [vmem:[%s404] sm:$0xff]
        %v406 = vld [vmem:[%s404 + $0x8] sm:$0xff]
        %v407 = vstv %s403
        %v408 = vmul.f32 %v407, %v405
        %v409 = vmul.f32 %v407, %v406
        %v410 = vadd.f32 %v374, %v408
        %v411 = vadd.f32 %v375, %v409
        %s412 = sld [smem:[#allocation3 + $0x16]]
        %s413 = scalar_lea.vmem %s212, 352
        %v414 = vld [vmem:[%s413] sm:$0xff]
        %v415 = vld [vmem:[%s413 + $0x8] sm:$0xff]
        %v416 = vstv %s412
        %v417 = vmul.f32 %v416, %v414
        %v418 = vmul.f32 %v416, %v415
        %v419 = vadd.f32 %v383, %v417
        %v420 = vadd.f32 %v384, %v418
        %s421 = sld [smem:[#allocation3 + $0x17]]
        %s422 = scalar_lea.vmem %s212, 368
        %v423 = vld [vmem:[%s422] sm:$0xff]
        %v424 = vld [vmem:[%s422 + $0x8] sm:$0xff]
        %v425 = vstv %s421
        %v426 = vmul.f32 %v425, %v423
        %v427 = vmul.f32 %v425, %v424
        %v428 = vadd.f32 %v392, %v426
        %v429 = vadd.f32 %v393, %v427
        %s430 = sld [smem:[#allocation3 + $0x18]]
        %s431 = scalar_lea.vmem %s212, 384
        %v432 = vld [vmem:[%s431] sm:$0xff]
        %v433 = vld [vmem:[%s431 + $0x8] sm:$0xff]
        %v434 = vstv %s430
        %v435 = vmul.f32 %v434, %v432
        %v436 = vmul.f32 %v434, %v433
        %v437 = vadd.f32 %v401, %v435
        %v438 = vadd.f32 %v402, %v436
        %s439 = sld [smem:[#allocation3 + $0x19]]
        %s440 = scalar_lea.vmem %s212, 400
        %v441 = vld [vmem:[%s440] sm:$0xff]
        %v442 = vld [vmem:[%s440 + $0x8] sm:$0xff]
        %v443 = vstv %s439
        %v444 = vmul.f32 %v443, %v441
        %v445 = vmul.f32 %v443, %v442
        %v446 = vadd.f32 %v410, %v444
        %v447 = vadd.f32 %v411, %v445
        %s448 = sld [smem:[#allocation3 + $0x1a]]
        %s449 = scalar_lea.vmem %s212, 416
        %v450 = vld [vmem:[%s449] sm:$0xff]
        %v451 = vld [vmem:[%s449 + $0x8] sm:$0xff]
        %v452 = vstv %s448
        %v453 = vmul.f32 %v452, %v450
        %v454 = vmul.f32 %v452, %v451
        %v455 = vadd.f32 %v419, %v453
        %v456 = vadd.f32 %v420, %v454
        %s457 = sld [smem:[#allocation3 + $0x1b]]
        %s458 = scalar_lea.vmem %s212, 432
        %v459 = vld [vmem:[%s458] sm:$0xff]
        %v460 = vld [vmem:[%s458 + $0x8] sm:$0xff]
        %v461 = vstv %s457
        %v462 = vmul.f32 %v461, %v459
        %v463 = vmul.f32 %v461, %v460
        %v464 = vadd.f32 %v428, %v462
        %v465 = vadd.f32 %v429, %v463
        %s466 = sld [smem:[#allocation3 + $0x1c]]
        %s467 = scalar_lea.vmem %s212, 448
        %v468 = vld [vmem:[%s467] sm:$0xff]
        %v469 = vld [vmem:[%s467 + $0x8] sm:$0xff]
        %v470 = vstv %s466
        %v471 = vmul.f32 %v470, %v468
        %v472 = vmul.f32 %v470, %v469
        %v473 = vadd.f32 %v437, %v471
        %v474 = vadd.f32 %v438, %v472
        %s475 = sld [smem:[#allocation3 + $0x1d]]
        %s476 = scalar_lea.vmem %s212, 464
        %v477 = vld [vmem:[%s476] sm:$0xff]
        %v478 = vld [vmem:[%s476 + $0x8] sm:$0xff]
        %v479 = vstv %s475
        %v480 = vmul.f32 %v479, %v477
        %v481 = vmul.f32 %v479, %v478
        %v482 = vadd.f32 %v446, %v480
        %v483 = vadd.f32 %v447, %v481
        %s484 = sld [smem:[#allocation3 + $0x1e]]
        %s485 = scalar_lea.vmem %s212, 480
        %v486 = vld [vmem:[%s485] sm:$0xff]
        %v487 = vld [vmem:[%s485 + $0x8] sm:$0xff]
        %v488 = vstv %s484
        %v489 = vmul.f32 %v488, %v486
        %v490 = vmul.f32 %v488, %v487
        %v491 = vadd.f32 %v455, %v489
        %v492 = vadd.f32 %v456, %v490
        %s493 = sld [smem:[#allocation3 + $0x1f]]
        %s494 = scalar_lea.vmem %s212, 496
        %v495 = vld [vmem:[%s494] sm:$0xff]
        %v496 = vld [vmem:[%s494 + $0x8] sm:$0xff]
        %v497 = vstv %s493
        %v498 = vmul.f32 %v497, %v495
        %v499 = vmul.f32 %v497, %v496
        %v500 = vadd.f32 %v464, %v498
        %v501 = vadd.f32 %v465, %v499
        %s502 = sld [smem:[#allocation3 + $0x20]]
        %s503 = scalar_lea.vmem %s212, 512
        %v504 = vld [vmem:[%s503] sm:$0xff]
        %v505 = vld [vmem:[%s503 + $0x8] sm:$0xff]
        %v506 = vstv %s502
        %v507 = vmul.f32 %v506, %v504
        %v508 = vmul.f32 %v506, %v505
        %v509 = vadd.f32 %v473, %v507
        %v510 = vadd.f32 %v474, %v508
        %s511 = sld [smem:[#allocation3 + $0x21]]
        %s512 = scalar_lea.vmem %s212, 528
        %v513 = vld [vmem:[%s512] sm:$0xff]
        %v514 = vld [vmem:[%s512 + $0x8] sm:$0xff]
        %v515 = vstv %s511
        %v516 = vmul.f32 %v515, %v513
        %v517 = vmul.f32 %v515, %v514
        %v518 = vadd.f32 %v482, %v516
        %v519 = vadd.f32 %v483, %v517
        %s520 = sld [smem:[#allocation3 + $0x22]]
        %s521 = scalar_lea.vmem %s212, 544
        %v522 = vld [vmem:[%s521] sm:$0xff]
        %v523 = vld [vmem:[%s521 + $0x8] sm:$0xff]
        %v524 = vstv %s520
        %v525 = vmul.f32 %v524, %v522
        %v526 = vmul.f32 %v524, %v523
        %v527 = vadd.f32 %v491, %v525
        %v528 = vadd.f32 %v492, %v526
        %s529 = sld [smem:[#allocation3 + $0x23]]
        %s530 = scalar_lea.vmem %s212, 560
        %v531 = vld [vmem:[%s530] sm:$0xff]
        %v532 = vld [vmem:[%s530 + $0x8] sm:$0xff]
        %v533 = vstv %s529
        %v534 = vmul.f32 %v533, %v531
        %v535 = vmul.f32 %v533, %v532
        %v536 = vadd.f32 %v500, %v534
        %v537 = vadd.f32 %v501, %v535
        %s538 = sld [smem:[#allocation3 + $0x24]]
        %s539 = scalar_lea.vmem %s212, 576
        %v540 = vld [vmem:[%s539] sm:$0xff]
        %v541 = vld [vmem:[%s539 + $0x8] sm:$0xff]
        %v542 = vstv %s538
        %v543 = vmul.f32 %v542, %v540
        %v544 = vmul.f32 %v542, %v541
        %v545 = vadd.f32 %v509, %v543
        %v546 = vadd.f32 %v510, %v544
        %s547 = sld [smem:[#allocation3 + $0x25]]
        %s548 = scalar_lea.vmem %s212, 592
        %v549 = vld [vmem:[%s548] sm:$0xff]
        %v550 = vld [vmem:[%s548 + $0x8] sm:$0xff]
        %v551 = vstv %s547
        %v552 = vmul.f32 %v551, %v549
        %v553 = vmul.f32 %v551, %v550
        %v554 = vadd.f32 %v518, %v552
        %v555 = vadd.f32 %v519, %v553
        %s556 = sld [smem:[#allocation3 + $0x26]]
        %s557 = scalar_lea.vmem %s212, 608
        %v558 = vld [vmem:[%s557] sm:$0xff]
        %v559 = vld [vmem:[%s557 + $0x8] sm:$0xff]
        %v560 = vstv %s556
        %v561 = vmul.f32 %v560, %v558
        %v562 = vmul.f32 %v560, %v559
        %v563 = vadd.f32 %v527, %v561
        %v564 = vadd.f32 %v528, %v562
        %s565 = sld [smem:[#allocation3 + $0x27]]
        %s566 = scalar_lea.vmem %s212, 624
        %v567 = vld [vmem:[%s566] sm:$0xff]
        %v568 = vld [vmem:[%s566 + $0x8] sm:$0xff]
        %v569 = vstv %s565
        %v570 = vmul.f32 %v569, %v567
        %v571 = vmul.f32 %v569, %v568
        %v572 = vadd.f32 %v536, %v570
        %v573 = vadd.f32 %v537, %v571
        %s574 = sld [smem:[#allocation3 + $0x28]]
        %s575 = scalar_lea.vmem %s212, 640
        %v576 = vld [vmem:[%s575] sm:$0xff]
        %v577 = vld [vmem:[%s575 + $0x8] sm:$0xff]
        %v578 = vstv %s574
        %v579 = vmul.f32 %v578, %v576
        %v580 = vmul.f32 %v578, %v577
        %v581 = vadd.f32 %v545, %v579
        %v582 = vadd.f32 %v546, %v580
        %s583 = sld [smem:[#allocation3 + $0x29]]
        %s584 = scalar_lea.vmem %s212, 656
        %v585 = vld [vmem:[%s584] sm:$0xff]
        %v586 = vld [vmem:[%s584 + $0x8] sm:$0xff]
        %v587 = vstv %s583
        %v588 = vmul.f32 %v587, %v585
        %v589 = vmul.f32 %v587, %v586
        %v590 = vadd.f32 %v554, %v588
        %v591 = vadd.f32 %v555, %v589
        %s592 = sld [smem:[#allocation3 + $0x2a]]
        %s593 = scalar_lea.vmem %s212, 672
        %v594 = vld [vmem:[%s593] sm:$0xff]
        %v595 = vld [vmem:[%s593 + $0x8] sm:$0xff]
        %v596 = vstv %s592
        %v597 = vmul.f32 %v596, %v594
        %v598 = vmul.f32 %v596, %v595
        %v599 = vadd.f32 %v563, %v597
        %v600 = vadd.f32 %v564, %v598
        %s601 = sld [smem:[#allocation3 + $0x2b]]
        %s602 = scalar_lea.vmem %s212, 688
        %v603 = vld [vmem:[%s602] sm:$0xff]
        %v604 = vld [vmem:[%s602 + $0x8] sm:$0xff]
        %v605 = vstv %s601
        %v606 = vmul.f32 %v605, %v603
        %v607 = vmul.f32 %v605, %v604
        %v608 = vadd.f32 %v572, %v606
        %v609 = vadd.f32 %v573, %v607
        %s610 = sld [smem:[#allocation3 + $0x2c]]
        %s611 = scalar_lea.vmem %s212, 704
        %v612 = vld [vmem:[%s611] sm:$0xff]
        %v613 = vld [vmem:[%s611 + $0x8] sm:$0xff]
        %v614 = vstv %s610
        %v615 = vmul.f32 %v614, %v612
        %v616 = vmul.f32 %v614, %v613
        %v617 = vadd.f32 %v581, %v615
        %v618 = vadd.f32 %v582, %v616
        %s619 = sld [smem:[#allocation3 + $0x2d]]
        %s620 = scalar_lea.vmem %s212, 720
        %v621 = vld [vmem:[%s620] sm:$0xff]
        %v622 = vld [vmem:[%s620 + $0x8] sm:$0xff]
        %v623 = vstv %s619
        %v624 = vmul.f32 %v623, %v621
        %v625 = vmul.f32 %v623, %v622
        %v626 = vadd.f32 %v590, %v624
        %v627 = vadd.f32 %v591, %v625
        %s628 = sld [smem:[#allocation3 + $0x2e]]
        %s629 = scalar_lea.vmem %s212, 736
        %v630 = vld [vmem:[%s629] sm:$0xff]
        %v631 = vld [vmem:[%s629 + $0x8] sm:$0xff]
        %v632 = vstv %s628
        %v633 = vmul.f32 %v632, %v630
        %v634 = vmul.f32 %v632, %v631
        %v635 = vadd.f32 %v599, %v633
        %v636 = vadd.f32 %v600, %v634
        %s637 = sld [smem:[#allocation3 + $0x2f]]
        %s638 = scalar_lea.vmem %s212, 752
        %v639 = vld [vmem:[%s638] sm:$0xff]
        %v640 = vld [vmem:[%s638 + $0x8] sm:$0xff]
        %v641 = vstv %s637
        %v642 = vmul.f32 %v641, %v639
        %v643 = vmul.f32 %v641, %v640
        %v644 = vadd.f32 %v608, %v642
        %v645 = vadd.f32 %v609, %v643
        %s646 = sld [smem:[#allocation3 + $0x30]]
        %s647 = scalar_lea.vmem %s212, 768
        %v648 = vld [vmem:[%s647] sm:$0xff]
        %v649 = vld [vmem:[%s647 + $0x8] sm:$0xff]
        %v650 = vstv %s646
        %v651 = vmul.f32 %v650, %v648
        %v652 = vmul.f32 %v650, %v649
        %v653 = vadd.f32 %v617, %v651
        %v654 = vadd.f32 %v618, %v652
        %s655 = sld [smem:[#allocation3 + $0x31]]
        %s656 = scalar_lea.vmem %s212, 784
        %v657 = vld [vmem:[%s656] sm:$0xff]
        %v658 = vld [vmem:[%s656 + $0x8] sm:$0xff]
        %v659 = vstv %s655
        %v660 = vmul.f32 %v659, %v657
        %v661 = vmul.f32 %v659, %v658
        %v662 = vadd.f32 %v626, %v660
        %v663 = vadd.f32 %v627, %v661
        %s664 = sld [smem:[#allocation3 + $0x32]]
        %s665 = scalar_lea.vmem %s212, 800
        %v666 = vld [vmem:[%s665] sm:$0xff]
        %v667 = vld [vmem:[%s665 + $0x8] sm:$0xff]
        %v668 = vstv %s664
        %v669 = vmul.f32 %v668, %v666
        %v670 = vmul.f32 %v668, %v667
        %v671 = vadd.f32 %v635, %v669
        %v672 = vadd.f32 %v636, %v670
        %s673 = sld [smem:[#allocation3 + $0x33]]
        %s674 = scalar_lea.vmem %s212, 816
        %v675 = vld [vmem:[%s674] sm:$0xff]
        %v676 = vld [vmem:[%s674 + $0x8] sm:$0xff]
        %v677 = vstv %s673
        %v678 = vmul.f32 %v677, %v675
        %v679 = vmul.f32 %v677, %v676
        %v680 = vadd.f32 %v644, %v678
        %v681 = vadd.f32 %v645, %v679
        %s682 = sld [smem:[#allocation3 + $0x34]]
        %s683 = scalar_lea.vmem %s212, 832
        %v684 = vld [vmem:[%s683] sm:$0xff]
        %v685 = vld [vmem:[%s683 + $0x8] sm:$0xff]
        %v686 = vstv %s682
        %v687 = vmul.f32 %v686, %v684
        %v688 = vmul.f32 %v686, %v685
        %v689 = vadd.f32 %v653, %v687
        %v690 = vadd.f32 %v654, %v688
        %s691 = sld [smem:[#allocation3 + $0x35]]
        %s692 = scalar_lea.vmem %s212, 848
        %v693 = vld [vmem:[%s692] sm:$0xff]
        %v694 = vld [vmem:[%s692 + $0x8] sm:$0xff]
        %v695 = vstv %s691
        %v696 = vmul.f32 %v695, %v693
        %v697 = vmul.f32 %v695, %v694
        %v698 = vadd.f32 %v662, %v696
        %v699 = vadd.f32 %v663, %v697
        %s700 = sld [smem:[#allocation3 + $0x36]]
        %s701 = scalar_lea.vmem %s212, 864
        %v702 = vld [vmem:[%s701] sm:$0xff]
        %v703 = vld [vmem:[%s701 + $0x8] sm:$0xff]
        %v704 = vstv %s700
        %v705 = vmul.f32 %v704, %v702
        %v706 = vmul.f32 %v704, %v703
        %v707 = vadd.f32 %v671, %v705
        %v708 = vadd.f32 %v672, %v706
        %s709 = sld [smem:[#allocation3 + $0x37]]
        %s710 = scalar_lea.vmem %s212, 880
        %v711 = vld [vmem:[%s710] sm:$0xff]
        %v712 = vld [vmem:[%s710 + $0x8] sm:$0xff]
        %v713 = vstv %s709
        %v714 = vmul.f32 %v713, %v711
        %v715 = vmul.f32 %v713, %v712
        %v716 = vadd.f32 %v680, %v714
        %v717 = vadd.f32 %v681, %v715
        %s718 = sld [smem:[#allocation3 + $0x38]]
        %s719 = scalar_lea.vmem %s212, 896
        %v720 = vld [vmem:[%s719] sm:$0xff]
        %v721 = vld [vmem:[%s719 + $0x8] sm:$0xff]
        %v722 = vstv %s718
        %v723 = vmul.f32 %v722, %v720
        %v724 = vmul.f32 %v722, %v721
        %v725 = vadd.f32 %v689, %v723
        %v726 = vadd.f32 %v690, %v724
        %s727 = sld [smem:[#allocation3 + $0x39]]
        %s728 = scalar_lea.vmem %s212, 912
        %v729 = vld [vmem:[%s728] sm:$0xff]
        %v730 = vld [vmem:[%s728 + $0x8] sm:$0xff]
        %v731 = vstv %s727
        %v732 = vmul.f32 %v731, %v729
        %v733 = vmul.f32 %v731, %v730
        %v734 = vadd.f32 %v698, %v732
        %v735 = vadd.f32 %v699, %v733
        %s736 = sld [smem:[#allocation3 + $0x3a]]
        %s737 = scalar_lea.vmem %s212, 928
        %v738 = vld [vmem:[%s737] sm:$0xff]
        %v739 = vld [vmem:[%s737 + $0x8] sm:$0xff]
        %v740 = vstv %s736
        %v741 = vmul.f32 %v740, %v738
        %v742 = vmul.f32 %v740, %v739
        %v743 = vadd.f32 %v707, %v741
        %v744 = vadd.f32 %v708, %v742
        %s745 = sld [smem:[#allocation3 + $0x3b]]
        %s746 = scalar_lea.vmem %s212, 944
        %v747 = vld [vmem:[%s746] sm:$0xff]
        %v748 = vld [vmem:[%s746 + $0x8] sm:$0xff]
        %v749 = vstv %s745
        %v750 = vmul.f32 %v749, %v747
        %v751 = vmul.f32 %v749, %v748
        %v752 = vadd.f32 %v716, %v750
        %v753 = vadd.f32 %v717, %v751
        %s754 = sld [smem:[#allocation3 + $0x3c]]
        %s755 = scalar_lea.vmem %s212, 960
        %v756 = vld [vmem:[%s755] sm:$0xff]
        %v757 = vld [vmem:[%s755 + $0x8] sm:$0xff]
        %v758 = vstv %s754
        %v759 = vmul.f32 %v758, %v756
        %v760 = vmul.f32 %v758, %v757
        %v761 = vadd.f32 %v725, %v759
        %v762 = vadd.f32 %v726, %v760
        %s763 = sld [smem:[#allocation3 + $0x3d]]
        %s764 = scalar_lea.vmem %s212, 976
        %v765 = vld [vmem:[%s764] sm:$0xff]
        %v766 = vld [vmem:[%s764 + $0x8] sm:$0xff]
        %v767 = vstv %s763
        %v768 = vmul.f32 %v767, %v765
        %v769 = vmul.f32 %v767, %v766
        %v770 = vadd.f32 %v734, %v768
        %v771 = vadd.f32 %v735, %v769
        %s772 = sld [smem:[#allocation3 + $0x3e]]
        %s773 = scalar_lea.vmem %s212, 992
        %v774 = vld [vmem:[%s773] sm:$0xff]
        %v775 = vld [vmem:[%s773 + $0x8] sm:$0xff]
        %v776 = vstv %s772
        %v777 = vmul.f32 %v776, %v774
        %v778 = vmul.f32 %v776, %v775
        %v779 = vadd.f32 %v743, %v777
        %v780 = vadd.f32 %v744, %v778
        %s781 = sld [smem:[#allocation3 + $0x3f]]
        %s782 = scalar_lea.vmem %s212, 1008
        %v783 = vld [vmem:[%s782] sm:$0xff]
        %v784 = vld [vmem:[%s782 + $0x8] sm:$0xff]
        %v785 = vstv %s781
        %v786 = vmul.f32 %v785, %v783
        %v787 = vmul.f32 %v785, %v784
        %v788 = vadd.f32 %v752, %v786
        %v789 = vadd.f32 %v753, %v787
        %v790 = vadd.f32 %v761, %v770
        %v791 = vadd.f32 %v762, %v771
        %v792 = vadd.f32 %v790, %v779
        %v793 = vadd.f32 %v791, %v780
        %v794 = vadd.f32 %v792, %v788
        %v795 = vadd.f32 %v793, %v789
        %s796 = sld [smem:[#allocation2]]
        %v797 = vstv %s796
        %v798 = vadd.f32 %v794, %v797
        %v799 = vadd.f32 %v795, %v797
        %vm800 = vcmask 130048
        %801 = vst.msk [vmem:[%s203] sm:$0xff] %vm800, %v798
        %802 = vst.msk [vmem:[%s203 + $0x8] sm:$0xff] %vm800, %v799
        %s803 = sand.u32 %s111, 1
        %s804 = scalar_lea.sflag [#allocation4], %s803
        %s805 = sand.u32 %s111, 1
        %s806 = smul.addr %s805, 16
        %s807 = scalar_lea.vmem [#allocation6], %s806
        // Predicated region
        $region37: #{_score_layer_impl.1} parent=31 // pred_check
          %p808 = pneg %p121
        $region38: #{_score_layer_impl.1} parent=31 // pred_check_branch
          %810 = sbr.rel (%p808) target = $region40
        $region39: #{_score_layer_impl.1} parent=31 // pred_region
          %s811 = smul.u32 2, %s24
          %s813 = ssub.s32 256, 256
          %814 = vsyncadd %s804, %s813
          %s815 = smul.addr %s23, 2
          %s816 = sadd.s32 %s811, %s815
          %s817 = smul.addr %s816, 128
          %s818 = scalar_lea.hbm %s3, %s817
          %s819 = sshll.u32 %s807, 4
          %s820 = int_to_ptr.vmem [resolvable:$true] %s819
          %825 = dma.vmem_to_hbm [thread:$0]  %s820, 256, %s818, %s804, 128, 128, 8
        $region40: #{_score_layer_impl.1} parent=31 // pred_fallthru
          _
      $region32: #{_score_layer_impl.1} parent=5 // pred_fallthru
        _
      %p826 = scmp.le.s32.totalorder 2, %s14
      // Predicated region
      $region41: #{_score_layer_impl.1} parent=5 // pred_check
        %p827 = pneg %p826
      $region42: #{_score_layer_impl.1} parent=5 // pred_check_branch
        %829 = sbr.rel (%p827) target = $region44
      $region43: #{_score_layer_impl.1} parent=5 // pred_region
        %s830 = ssub.s32 %s14, 2
        // Predicated region
        $region45: #{_score_layer_impl.1} parent=43 // pred_check
          %p831 = pneg %p127
        $region46: #{_score_layer_impl.1} parent=43 // pred_check_branch
          %833 = sbr.rel (%p831) target = $region48
        $region47: #{_score_layer_impl.1} parent=43 // pred_region
          %s834 = sand.u32 %s112, 1
          %s835 = scalar_lea.sflag [#allocation4], %s834
          %s836 = sand.u32 %s112, 1
          %s837 = smul.addr %s836, 16
          %s838 = scalar_lea.vmem [#allocation6], %s837
          %839 = dma.done %s835, 256
        $region48: #{_score_layer_impl.1} parent=43 // pred_fallthru
          _
      $region44: #{_score_layer_impl.1} parent=5 // pred_fallthru
        _
    $region6: #{_score_layer_impl.1} parent=1 // loop_footer
      %s18 = sadd.s32 1, %s14
    $region7: #{_score_layer_impl.1} parent=1 // loop_footer_branch
      %13 = sbr.rel target = $region3
    $region8: #{_score_layer_impl.1} parent=1 // loop_exit
      _
    %840 = vsyncpa [#allocation4], 1
    %s841 = scalar_lea.sflag [#allocation4], 1
    %842 = vsyncpa %s841, 1
    %843 = vsyncpa [#allocation5], 1
    %s844 = scalar_lea.sflag [#allocation5], 1
    %845 = vsyncpa %s844, 1

</llo_original>
